<compile_context>
chip_gen: v7x
topology: tpu7x:2x2x1
jax: 0.10.0
libtpu: 0.0.40
codegen_flags: <defaults>
</compile_context>

<pallas_src>
import math
import functools

import jax
import jax.numpy as jnp
from jax.experimental import pallas as pl
from jax.experimental.pallas import tpu as pltpu


LOG_1E4 = float(math.log(1e-4))  # log of the one-hot clamp floor (0.0001)


def _round_up(x, m):
    return ((x + m - 1) // m) * m


def _device_kind():
    try:
        return jax.devices()[0].device_kind.lower()
    except Exception:
        return ""


def _vmem_capacity_bytes():
    try:
        return int(pltpu.get_tpu_info().vmem_capacity_bytes)
    except Exception:
        return 64 * 1024 * 1024  # conservative fallback (v7x-sized)


def _sce_kernel(pred_ref, labels_ref, out_ref, acc_ce_ref, acc_rce_ref, *,
                n_total, tile_n, steps):
    j = pl.program_id(0)   # row split (one per TensorCore on v7x)
    k = pl.program_id(1)   # sequential reduction step within the split

    @pl.when(k == 0)
    def _init():
        acc_ce_ref[...] = jnp.zeros_like(acc_ce_ref)    # per-row running CE sums
        acc_rce_ref[...] = jnp.zeros_like(acc_rce_ref)  # per-row running RCE sums

    logits = pred_ref[...].astype(jnp.float32)   # (tn, C)
    labels = labels_ref[...]                     # (tn, 1) int32
    tn, C = logits.shape

    # Row-validity mask: the logical (unclamped) tile index tells us which
    # global rows this step covers; tail / duplicated clamped tiles get masked.
    block = j * steps + k
    rows = block * tile_n + jax.lax.broadcasted_iota(jnp.int32, (tn, 1), 0)
    valid = rows < n_total

    # Numerically-stable softmax pieces over the class (lane) axis.
    m = jnp.max(logits, axis=-1, keepdims=True)
    shifted = logits - m
    exps = jnp.exp(shifted)
    sumexp = jnp.sum(exps, axis=-1, keepdims=True)     # >= 1, log is safe

    # One-hot via iota compare (no gather); single masked lane reduce gives
    # shifted[label] exactly (all other addends are literal zeros).
    onehot = jax.lax.broadcasted_iota(jnp.int32, (tn, C), 1) == labels
    shifted_lbl = jnp.sum(jnp.where(onehot, shifted, 0.0), axis=-1, keepdims=True)

    # CE per row without materializing the full log-softmax:
    #   -logp[label] = log(sumexp) - shifted[label]
    ce_row = jnp.log(sumexp) - shifted_lbl              # (tn, 1)

    # RCE per row:  -log(1e-4) * (sum_c p_c - p_c[label]) with p = max(softmax, 1e-7).
    # Upper clip is dead (p <= 1 always); p_lbl reuses shifted_lbl -> (tn, 1) ops only.
    inv_sumexp = pl.reciprocal(sumexp, approx=False)    # (tn, 1): cheap, exact
    p_c = jnp.maximum(exps * inv_sumexp, 1e-7)          # broadcast multiply, no divide
    p_sum = jnp.sum(p_c, axis=-1, keepdims=True)
    p_lbl = jnp.maximum(jnp.exp(shifted_lbl) * inv_sumexp, 1e-7)   # (tn, 1)
    rce_row = jnp.float32(-LOG_1E4) * (p_sum - p_lbl)   # (tn, 1)

    zero = jnp.float32(0.0)
    # Plain VPU adds into the per-row VMEM accumulators (no per-step sublane
    # reduce / SMEM round trip).  Keep these as selects, NOT 0/1 multiplies:
    # out-of-bounds rows may hold NaN/Inf that must not propagate.
    acc_ce_ref[...] += jnp.where(valid, ce_row, zero)
    acc_rce_ref[...] += jnp.where(valid, rce_row, zero)

    @pl.when(k == pl.num_programs(1) - 1)
    def _finish():
        ce_sum = jnp.sum(acc_ce_ref[...])
        rce_sum = jnp.sum(acc_rce_ref[...])
        # Lane-padded partial sums: lane 0 = CE sum, lane 1 = RCE sum.
        lanes = jax.lax.broadcasted_iota(jnp.int32, out_ref.shape, 2)
        out_ref[...] = jnp.where(lanes == 0, ce_sum,
                                 jnp.where(lanes == 1, rce_sum, zero))


def sce_loss(pred, labels, *, alpha, beta, tile_n=None, num_splits=None,
             use_core_parallel=None, vmem_budget_bytes=None):
    """SCELoss.forward: pred (N, C) logits, labels (N,) int -> scalar loss."""
    N, C = pred.shape
    labels2d = labels.astype(jnp.int32).reshape(N, 1)

    in_esize = pred.dtype.itemsize
    sub = 16 if in_esize < 4 else 8     # bf16 min tile is (16, 128)

    cap = _vmem_capacity_bytes()
    if vmem_budget_bytes is None:
        # Tile-sizing budget: large tiles amortize step overhead but stay well
        # inside v7x's 64 MiB physical VMEM (v5e/v6e have 128 MiB).
        vmem_budget_bytes = min(int(cap * 0.55), 48 * 1024 * 1024)

    # Per-row VMEM footprint: double-buffered pred tiles, f32 body temporaries,
    # the lane-padded (tile_n, 1) labels double buffer and the two lane-padded
    # (tile_n, 1) f32 accumulators.
    per_row_bytes = (2 * C * in_esize      # pred double buffer
                     + 6 * C * 4           # f32 temporaries (logits/exps/onehot/p/selects)
                     + 2 * 128 * 4         # labels block x2 buffers, lane-padded
                     + 2 * 128 * 4)        # acc_ce / acc_rce scratch, lane-padded

    if tile_n is None:
        tile_n = vmem_budget_bytes // per_row_bytes
        tile_n = max(sub, min(8192, (tile_n // sub) * sub))
    else:
        tile_n = max(sub, _round_up(int(tile_n), sub))
    tile_n = min(tile_n, _round_up(N, sub))  # never tile past the (padded) problem

    num_blocks = pl.cdiv(N, tile_n)          # real row tiles covering N
    kind = _device_kind()
    if num_splits is None:
        num_splits = 2 if "v7" in kind else 1   # v7x: 2 TCs; v5e/v6e: 1 TC
    num_splits = max(1, min(int(num_splits), num_blocks))
    steps = pl.cdiv(num_blocks, num_splits)     # sequential steps per split

    if use_core_parallel is None:
        use_core_parallel = (num_splits > 1) and ("v7" in kind)

    # Index maps clamp to the last real tile; excess / tail rows are masked in
    # the kernel via the row-validity mask, so no N % tile_n restriction.
    def row_block(j, k):
        return jnp.minimum(j * steps + k, num_blocks - 1)

    pred_map = lambda j, k: (row_block(j, k), 0)
    lab_map = lambda j, k: (row_block(j, k), 0)
    out_map = lambda j, k: (j, 0, 0)

    est_vmem = tile_n * per_row_bytes + 2 * 8 * 128 * 4
    vmem_limit = int(min(cap * 3 // 4,
                         max(32 * 1024 * 1024, est_vmem * 13 // 10)))

    split_sem = pltpu.CORE_PARALLEL if use_core_parallel else pltpu.PARALLEL

    kernel = functools.partial(_sce_kernel, n_total=N, tile_n=tile_n, steps=steps)

    partial = pl.pallas_call(
        kernel,
        out_shape=jax.ShapeDtypeStruct((num_splits, 8, 128), jnp.float32),
        grid_spec=pltpu.PrefetchScalarGridSpec(
            num_scalar_prefetch=0,
            grid=(num_splits, steps),
            in_specs=[
                pl.BlockSpec((tile_n, C), pred_map),
                pl.BlockSpec((tile_n, 1), lab_map),
            ],
            out_specs=pl.BlockSpec((1, 8, 128), out_map),
            scratch_shapes=[pltpu.VMEM((tile_n, 1), jnp.float32),
                            pltpu.VMEM((tile_n, 1), jnp.float32)],
        ),
        compiler_params=pltpu.CompilerParams(
            dimension_semantics=(split_sem, pltpu.ARBITRARY),
            vmem_limit_bytes=vmem_limit,
        ),
    )(pred, labels2d)

    ce_mean = jnp.sum(partial[:, 0, 0]) / jnp.float32(N)
    rce_mean = jnp.sum(partial[:, 0, 1]) / jnp.float32(N)
    return alpha * ce_mean + beta * rce_mean


def _sce_loss_ref(pred, labels, *, alpha, beta):
    """Pure-JAX reference mirroring the PyTorch forward."""
    N, C = pred.shape
    logp = jax.nn.log_softmax(pred, axis=1)
    ce = -jnp.mean(logp[jnp.arange(N), labels])
    p = jnp.clip(jax.nn.softmax(pred, axis=1), 1e-7, 1.0)
    onehot = jnp.clip(jax.nn.one_hot(labels, C, dtype=jnp.float32), 1e-4, 1.0)
    rce = -jnp.sum(p * jnp.log(onehot), axis=1)
    return alpha * ce + beta * jnp.mean(rce)


if __name__ == "__main__":
    key = jax.random.PRNGKey(0)
    k_pred, k_lab = jax.random.split(key)

    # Small demo shapes: lane-dense class dim (C = 128), N not a multiple of the
    # forced tile size so the tail-row masking path is exercised.
    N, C = 300, 128
    alpha, beta = 0.1, 1.0

    pred = jax.random.normal(k_pred, (N, C), dtype=jnp.float32)
    labels = jax.random.randint(k_lab, (N,), 0, C, dtype=jnp.int32)

    ref = _sce_loss_ref(pred, labels, alpha=alpha, beta=beta)

    # Auto-sized tiles (single large tile for this small demo problem).
    loss_auto = jax.block_until_ready(sce_loss(pred, labels, alpha=alpha, beta=beta))

    # Forced small tiles + 2-way split: exercises the clamped index map, the
    # masked partial tail tile and the duplicated-tile masking.  Core-parallel
    # semantics explicitly off so this path is identical on every generation.
    loss_tiled = jax.block_until_ready(
        sce_loss(pred, labels, alpha=alpha, beta=beta, tile_n=64,
                 num_splits=2, use_core_parallel=False))

    # bf16 logits (halved HBM traffic; kernel upcasts to f32 internally and
    # tile_n rounds to a multiple of 16).
    pred_bf16 = pred.astype(jnp.bfloat16)
    ref_bf16 = _sce_loss_ref(pred_bf16.astype(jnp.float32), labels,
                             alpha=alpha, beta=beta)
    loss_bf16 = jax.block_until_ready(
        sce_loss(pred_bf16, labels, alpha=alpha, beta=beta))

    assert jnp.allclose(loss_auto, ref, rtol=1e-5, atol=1e-5), (loss_auto, ref)
    assert jnp.allclose(loss_tiled, ref, rtol=1e-5, atol=1e-5), (loss_tiled, ref)
    assert jnp.allclose(loss_bf16, ref_bf16, rtol=1e-5, atol=1e-5), (loss_bf16, ref_bf16)

    print("KERNEL_OK")
</pallas_src>

<mosaic_0001>
module attributes {stable_mosaic.version = 11 : i64} {
  func.func @_sce_kernel(%arg0: i32, %arg1: i32, %arg2: memref<304x128xf32, #tpu.memory_space<vmem>>, %arg3: memref<304x1xi32, #tpu.memory_space<vmem>>, %arg4: memref<1x8x128xf32, #tpu.memory_space<vmem>>, %arg5: memref<304x1xf32, #tpu.memory_space<vmem>>, %arg6: memref<304x1xf32, #tpu.memory_space<vmem>>) attributes {dimension_semantics = [#tpu.dimension_semantics<parallel>, #tpu.dimension_semantics<arbitrary>], iteration_bounds = array<i64: 1, 1>, scalar_prefetch = 0 : i64, scratch_operands = 2 : i64, tpu.core_type = #tpu.core_type<tc>, window_params = [{transform_indices = @transform_0, window_bounds = array<i64: 304, 128>}, {transform_indices = @transform_1, window_bounds = array<i64: 304, 1>}, {transform_indices = @transform_2, window_bounds = array<i64: 1, 8, 128>}]} {
    %c0_i32 = arith.constant 0 : i32
    %0 = arith.cmpi eq, %arg1, %c0_i32 : i32
    %1 = arith.extui %0 : i1 to i32
    %c0_i32_0 = arith.constant 0 : i32
    %2 = arith.cmpi ne, %1, %c0_i32_0 : i32
    scf.if %2 {
      %cst_24 = arith.constant 0.000000e+00 : f32
      %56 = vector.broadcast %cst_24 : f32 to vector<304x1xf32>
      %c0_25 = arith.constant 0 : index
      %c0_26 = arith.constant 0 : index
      %57 = vector.load %arg5[%c0_25, %c0_26] : memref<304x1xf32, #tpu.memory_space<vmem>>, vector<304x1xf32>
      tpu.vector_store %arg5[%c0_25, %c0_26], %56 {strides = array<i32>} : memref<304x1xf32, #tpu.memory_space<vmem>>, vector<304x1xf32>,
      %cst_27 = arith.constant 0.000000e+00 : f32
      %58 = vector.broadcast %cst_27 : f32 to vector<304x1xf32>
      %c0_28 = arith.constant 0 : index
      %c0_29 = arith.constant 0 : index
      %59 = vector.load %arg6[%c0_28, %c0_29] : memref<304x1xf32, #tpu.memory_space<vmem>>, vector<304x1xf32>
      tpu.vector_store %arg6[%c0_28, %c0_29], %58 {strides = array<i32>} : memref<304x1xf32, #tpu.memory_space<vmem>>, vector<304x1xf32>,
    } else {
    }
    %c0 = arith.constant 0 : index
    %c0_1 = arith.constant 0 : index
    %3 = vector.load %arg2[%c0, %c0_1] : memref<304x128xf32, #tpu.memory_space<vmem>>, vector<304x128xf32>
    %c0_2 = arith.constant 0 : index
    %c0_3 = arith.constant 0 : index
    %4 = vector.load %arg3[%c0_2, %c0_3] : memref<304x1xi32, #tpu.memory_space<vmem>>, vector<304x1xi32>
    %c1_i32 = arith.constant 1 : i32
    %5 = arith.muli %arg0, %c1_i32 : i32
    %6 = arith.addi %5, %arg1 : i32
    %c304_i32 = arith.constant 304 : i32
    %7 = arith.muli %6, %c304_i32 : i32
    %8 = tpu.iota {dimensions = array<i32: 0>} : vector<304x1xi32>
    %9 = vector.broadcast %7 : i32 to vector<304x1xi32>
    %10 = arith.addi %9, %8 : vector<304x1xi32>
    %c300_i32 = arith.constant 300 : i32
    %11 = vector.broadcast %c300_i32 : i32 to vector<304x1xi32>
    %12 = arith.cmpi slt, %10, %11 : vector<304x1xi32>
    %cst = arith.constant dense<0xFF800000> : vector<304xf32>
    %13 = vector.multi_reduction <maximumf>, %3, %cst [1] : vector<304x128xf32> to vector<304xf32>
    %14 = vector.shape_cast %13 : vector<304xf32> to vector<304x1xf32>
    %15 = vector.broadcast %14 : vector<304x1xf32> to vector<304x128xf32>
    %16 = arith.subf %3, %15 : vector<304x128xf32>
    %17 = math.exp %16 : vector<304x128xf32>
    %cst_4 = arith.constant dense<0.000000e+00> : vector<304xf32>
    %18 = vector.multi_reduction <add>, %17, %cst_4 [1] : vector<304x128xf32> to vector<304xf32>
    %19 = vector.shape_cast %18 : vector<304xf32> to vector<304x1xf32>
    %20 = tpu.iota {dimensions = array<i32: 1>} : vector<304x128xi32>
    %21 = vector.broadcast %4 : vector<304x1xi32> to vector<304x128xi32>
    %22 = arith.cmpi eq, %20, %21 : vector<304x128xi32>
    %cst_5 = arith.constant 0.000000e+00 : f32
    %23 = vector.broadcast %cst_5 : f32 to vector<304x128xf32>
    %24 = arith.select %22, %16, %23 : vector<304x128xi1>, vector<304x128xf32>
    %cst_6 = arith.constant dense<0.000000e+00> : vector<304xf32>
    %25 = vector.multi_reduction <add>, %24, %cst_6 [1] : vector<304x128xf32> to vector<304xf32>
    %26 = vector.shape_cast %25 : vector<304xf32> to vector<304x1xf32>
    %27 = math.log %19 : vector<304x1xf32>
    %28 = arith.subf %27, %26 : vector<304x1xf32>
    %29 = tpu.reciprocal %19 : vector<304x1xf32> -> vector<304x1xf32>
    %30 = vector.broadcast %29 : vector<304x1xf32> to vector<304x128xf32>
    %31 = arith.mulf %17, %30 : vector<304x128xf32>
    %cst_7 = arith.constant 1.000000e-07 : f32
    %32 = vector.broadcast %cst_7 : f32 to vector<304x128xf32>
    %33 = arith.maximumf %31, %32 : vector<304x128xf32>
    %cst_8 = arith.constant dense<0.000000e+00> : vector<304xf32>
    %34 = vector.multi_reduction <add>, %33, %cst_8 [1] : vector<304x128xf32> to vector<304xf32>
    %35 = vector.shape_cast %34 : vector<304xf32> to vector<304x1xf32>
    %36 = math.exp %26 : vector<304x1xf32>
    %37 = arith.mulf %36, %29 : vector<304x1xf32>
    %cst_9 = arith.constant 1.000000e-07 : f32
    %38 = vector.broadcast %cst_9 : f32 to vector<304x1xf32>
    %39 = arith.maximumf %37, %38 : vector<304x1xf32>
    %40 = arith.subf %35, %39 : vector<304x1xf32>
    %cst_10 = arith.constant 9.21034049 : f32
    %41 = vector.broadcast %cst_10 : f32 to vector<304x1xf32>
    %42 = arith.mulf %41, %40 : vector<304x1xf32>
    %c0_11 = arith.constant 0 : index
    %c0_12 = arith.constant 0 : index
    %43 = vector.load %arg5[%c0_11, %c0_12] : memref<304x1xf32, #tpu.memory_space<vmem>>, vector<304x1xf32>
    %cst_13 = arith.constant 0.000000e+00 : f32
    %44 = vector.broadcast %cst_13 : f32 to vector<304x1xf32>
    %45 = arith.select %12, %28, %44 : vector<304x1xi1>, vector<304x1xf32>
    %46 = arith.addf %43, %45 : vector<304x1xf32>
    %c0_14 = arith.constant 0 : index
    %c0_15 = arith.constant 0 : index
    %47 = vector.load %arg5[%c0_14, %c0_15] : memref<304x1xf32, #tpu.memory_space<vmem>>, vector<304x1xf32>
    tpu.vector_store %arg5[%c0_14, %c0_15], %46 {strides = array<i32>} : memref<304x1xf32, #tpu.memory_space<vmem>>, vector<304x1xf32>,
    %c0_16 = arith.constant 0 : index
    %c0_17 = arith.constant 0 : index
    %48 = vector.load %arg6[%c0_16, %c0_17] : memref<304x1xf32, #tpu.memory_space<vmem>>, vector<304x1xf32>
    %cst_18 = arith.constant 0.000000e+00 : f32
    %49 = vector.broadcast %cst_18 : f32 to vector<304x1xf32>
    %50 = arith.select %12, %42, %49 : vector<304x1xi1>, vector<304x1xf32>
    %51 = arith.addf %48, %50 : vector<304x1xf32>
    %c0_19 = arith.constant 0 : index
    %c0_20 = arith.constant 0 : index
    %52 = vector.load %arg6[%c0_19, %c0_20] : memref<304x1xf32, #tpu.memory_space<vmem>>, vector<304x1xf32>
    tpu.vector_store %arg6[%c0_19, %c0_20], %51 {strides = array<i32>} : memref<304x1xf32, #tpu.memory_space<vmem>>, vector<304x1xf32>,
    %c0_i32_21 = arith.constant 0 : i32
    %53 = arith.cmpi eq, %arg1, %c0_i32_21 : i32
    %54 = arith.extui %53 : i1 to i32
    %cst_22 = arith.constant 0.000000e+00 : f32
    %c0_i32_23 = arith.constant 0 : i32
    %55 = arith.cmpi ne, %54, %c0_i32_23 : i32
    scf.if %55 {
      %c0_24 = arith.constant 0 : index
      %c0_25 = arith.constant 0 : index
      %56 = vector.load %arg5[%c0_24, %c0_25] : memref<304x1xf32, #tpu.memory_space<vmem>>, vector<304x1xf32>
      %57 = vector.shape_cast %56 : vector<304x1xf32> to vector<1x304x1xf32>
      %cst_26 = arith.constant dense<0.000000e+00> : vector<1xf32>
      %58 = vector.multi_reduction <add>, %57, %cst_26 [1, 2] : vector<1x304x1xf32> to vector<1xf32>
      %59 = vector.shape_cast %58 : vector<1xf32> to vector<1x1x1xf32>
      %60 = vector.extract %59[0, 0, 0] : f32 from vector<1x1x1xf32>
      %c0_27 = arith.constant 0 : index
      %c0_28 = arith.constant 0 : index
      %61 = vector.load %arg6[%c0_27, %c0_28] : memref<304x1xf32, #tpu.memory_space<vmem>>, vector<304x1xf32>
      %62 = vector.shape_cast %61 : vector<304x1xf32> to vector<1x304x1xf32>
      %cst_29 = arith.constant dense<0.000000e+00> : vector<1xf32>
      %63 = vector.multi_reduction <add>, %62, %cst_29 [1, 2] : vector<1x304x1xf32> to vector<1xf32>
      %64 = vector.shape_cast %63 : vector<1xf32> to vector<1x1x1xf32>
      %65 = vector.extract %64[0, 0, 0] : f32 from vector<1x1x1xf32>
      %66 = tpu.iota {dimensions = array<i32: 2>} : vector<1x8x128xi32>
      %c0_i32_30 = arith.constant 0 : i32
      %67 = vector.broadcast %c0_i32_30 : i32 to vector<1x8x128xi32>
      %68 = arith.cmpi eq, %66, %67 : vector<1x8x128xi32>
      %c1_i32_31 = arith.constant 1 : i32
      %69 = vector.broadcast %c1_i32_31 : i32 to vector<1x8x128xi32>
      %70 = arith.cmpi eq, %66, %69 : vector<1x8x128xi32>
      %71 = vector.broadcast %65 : f32 to vector<1x8x128xf32>
      %72 = vector.broadcast %cst_22 : f32 to vector<1x8x128xf32>
      %73 = arith.select %70, %71, %72 : vector<1x8x128xi1>, vector<1x8x128xf32>
      %74 = vector.broadcast %60 : f32 to vector<1x8x128xf32>
      %75 = arith.select %68, %74, %73 : vector<1x8x128xi1>, vector<1x8x128xf32>
      %c0_32 = arith.constant 0 : index
      %c0_33 = arith.constant 0 : index
      %c0_34 = arith.constant 0 : index
      %76 = vector.load %arg4[%c0_32, %c0_33, %c0_34] : memref<1x8x128xf32, #tpu.memory_space<vmem>>, vector<1x8x128xf32>
      tpu.vector_store %arg4[%c0_32, %c0_33, %c0_34], %75 {strides = array<i32>} : memref<1x8x128xf32, #tpu.memory_space<vmem>>, vector<1x8x128xf32>,
    } else {
    }
    return
  }
  func.func @transform_0(%arg0: i32, %arg1: i32) -> (i32, i32) {
    %c1_i32 = arith.constant 1 : i32
    %0 = arith.muli %arg0, %c1_i32 : i32
    %1 = arith.addi %0, %arg1 : i32
    %c0_i32 = arith.constant 0 : i32
    %2 = arith.minsi %1, %c0_i32 : i32
    %c0_i32_0 = arith.constant 0 : i32
    %c0_i32_1 = arith.constant 0 : i32
    return %2, %c0_i32_0 : i32, i32
  }
  func.func @transform_1(%arg0: i32, %arg1: i32) -> (i32, i32) {
    %c1_i32 = arith.constant 1 : i32
    %0 = arith.muli %arg0, %c1_i32 : i32
    %1 = arith.addi %0, %arg1 : i32
    %c0_i32 = arith.constant 0 : i32
    %2 = arith.minsi %1, %c0_i32 : i32
    %c0_i32_0 = arith.constant 0 : i32
    %c0_i32_1 = arith.constant 0 : i32
    return %2, %c0_i32_0 : i32, i32
  }
  func.func @transform_2(%arg0: i32, %arg1: i32) -> (i32, i32, i32) {
    %c0_i32 = arith.constant 0 : i32
    %c0_i32_0 = arith.constant 0 : i32
    %c0_i32_1 = arith.constant 0 : i32
    return %arg0, %c0_i32, %c0_i32_0 : i32, i32, i32
  }
}

</mosaic_0001>

<llo_original>
// kernel: tpu_custom_call.1
$region0: #{tpu_custom_call.1}
  #allocation0 [shape = 'u32[]', space=smem, size = 0x4, offset = 0x4, fixed_abs, tag = 'smem constant byte address 0x4 - core index']
  #allocation1 [shape = 'u32[144,128]{1,0:T(1,128)}', space=vmem, size = 0x12000, scoped, tag = 'internal scratch']
  #allocation2 [shape = 'f32[304,1]{1,0:T(8,128)}', space=vmem, size = 0x26000, scoped, tag = 'scratch operand']
  #allocation3 [shape = 'f32[304,1]{1,0:T(8,128)}', space=vmem, size = 0x26000, scoped, tag = 'scratch operand']
  %s0 = inlined_call_operand.vmem [shape: f32[300,128], index: 0, kind: input, shape index: {}]
  %s1 = inlined_call_operand.vmem [shape: s32[300,1], index: 1, kind: input, shape index: {}]
  %s2 = inlined_call_operand.hbm [shape: f32[1,8,128], index: 2, kind: output, shape index: {}]
  %s3 = sld [smem:[#allocation0]]
  $region26: #{tpu_custom_call.1} parent=0
    _
  %s5 = ssub.s32 1, %s3
  %s6 = scalar_select 0, %s5, %s3
  $region1: #{tpu_custom_call.1} parent=0
    #allocation4 [shape = 'u8[4096]{0}', space=vmem, size = 0x1000, scoped, tag = 'output window, operand 0, single buffered']
    #allocation5 [shape = 's32[1]{0}', space=sflag, size = 0x4, scoped, tag = 'scoped memory for tpu_custom_call.1']
    %7 = vsyncpa [#allocation5], 0
    // Predicated region
    $region2: #{tpu_custom_call.1} parent=1 // pred_check
      _
    $region3: #{tpu_custom_call.1} parent=1 // pred_check_branch
      %9 = sbr.rel (0) target = $region5
    $region4: #{tpu_custom_call.1} parent=1 // pred_region
      %s10 = sadd.s32 0, 0
      %p11 = scmp.lt.s32.totalorder %s10, 0
      %s12 = scalar_select %p11, %s10, 0
      %s13 = smul.u32 38, %s12
      %p14 = scmp.lt.s32.totalorder %s13, 37
      %s15 = scalar_select %p14, %s13, 37
      %s16 = smul.addr %s15, 8
      %s17 = scalar_lea.vmem %s0, %s16
      %s18 = sadd.s32 0, 0
      %p19 = scmp.lt.s32.totalorder %s18, 0
      %s20 = scalar_select %p19, %s18, 0
      %s21 = smul.u32 38, %s20
    $region5: #{tpu_custom_call.1} parent=1 // pred_fallthru
      _
    // Predicated region
    $region6: #{tpu_custom_call.1} parent=1 // pred_check
      _
    $region7: #{tpu_custom_call.1} parent=1 // pred_check_branch
      %23 = sbr.rel (0) target = $region9
    $region8: #{tpu_custom_call.1} parent=1 // pred_region
      %s24 = sadd.s32 0, 0
      %p25 = scmp.lt.s32.totalorder %s24, 0
      %s26 = scalar_select %p25, %s24, 0
      %s27 = smul.u32 38, %s26
      %p28 = scmp.lt.s32.totalorder %s27, 37
      %s29 = scalar_select %p28, %s27, 37
      %s30 = smul.addr %s29, 8
      %s31 = scalar_lea.vmem %s1, %s30
      %s32 = sadd.s32 0, 0
      %p33 = scmp.lt.s32.totalorder %s32, 0
      %s34 = scalar_select %p33, %s32, 0
      %s35 = smul.u32 38, %s34
    $region9: #{tpu_custom_call.1} parent=1 // pred_fallthru
      _
    %s36 = sadd.s32 0, 0
    %p37 = scmp.lt.s32.totalorder %s36, 0
    %s38 = scalar_select %p37, %s36, 0
    %s39 = smul.u32 38, %s38
    %p40 = scmp.lt.s32.totalorder %s39, 37
    %s41 = scalar_select %p40, %s39, 37
    %s42 = smul.addr %s41, 8
    %s43 = scalar_lea.vmem %s0, %s42
    %s44 = sadd.s32 0, 0
    %p45 = scmp.lt.s32.totalorder %s44, 0
    %s46 = scalar_select %p45, %s44, 0
    %s47 = smul.u32 38, %s46
    %p48 = scmp.lt.s32.totalorder %s47, 37
    %s49 = scalar_select %p48, %s47, 37
    %s50 = smul.addr %s49, 8
    %s51 = scalar_lea.vmem %s1, %s50
    %s52 = sadd.s32 0, 0
    %p53 = scmp.lt.s32.totalorder %s52, 0
    %s54 = scalar_select %p53, %s52, 0
    %s55 = smul.u32 38, %s54
    %p56 = scmp.lt.s32.totalorder %s55, 37
    %s57 = scalar_select %p56, %s55, 37
    %s58 = smul.addr %s57, 8
    %s59 = scalar_lea.vmem %s0, %s58
    %s60 = sadd.s32 0, 0
    %p61 = scmp.lt.s32.totalorder %s60, 0
    %s62 = scalar_select %p61, %s60, 0
    %s63 = smul.u32 38, %s62
    %s64 = sadd.s32 0, 0
    %p65 = scmp.lt.s32.totalorder %s64, 0
    %s66 = scalar_select %p65, %s64, 0
    %s67 = smul.u32 38, %s66
    %p68 = scmp.lt.s32.totalorder %s67, 37
    %s69 = scalar_select %p68, %s67, 37
    %s70 = smul.addr %s69, 8
    %s71 = scalar_lea.vmem %s1, %s70
    %s72 = sadd.s32 0, 0
    %p73 = scmp.lt.s32.totalorder %s72, 0
    %s74 = scalar_select %p73, %s72, 0
    %s75 = smul.u32 38, %s74
    %p76 = scmp.eq.s32.totalorder 0, 0
    // Predicated region
    $region10: #{tpu_custom_call.1} parent=1 // pred_check
      %p77 = pneg %p76
    $region11: #{tpu_custom_call.1} parent=1 // pred_check_branch
      %79 = sbr.rel (%p77) target = $region13
    $region12: #{tpu_custom_call.1} parent=1 // pred_region
      %vm80 = vcmask 7168
      %81 = vst.msk [vmem:[#allocation2] sm:$0xff] %vm80, 0.0
      %82 = vst.msk [vmem:[#allocation2 + $0x8] sm:$0xff] %vm80, 0.0
      %83 = vst.msk [vmem:[#allocation2 + $0x10] sm:$0xff] %vm80, 0.0
      %84 = vst.msk [vmem:[#allocation2 + $0x18] sm:$0xff] %vm80, 0.0
      %85 = vst.msk [vmem:[#allocation2 + $0x20] sm:$0xff] %vm80, 0.0
      %86 = vst.msk [vmem:[#allocation2 + $0x28] sm:$0xff] %vm80, 0.0
      %87 = vst.msk [vmem:[#allocation2 + $0x30] sm:$0xff] %vm80, 0.0
      %88 = vst.msk [vmem:[#allocation2 + $0x38] sm:$0xff] %vm80, 0.0
      %89 = vst.msk [vmem:[#allocation2 + $0x40] sm:$0xff] %vm80, 0.0
      %90 = vst.msk [vmem:[#allocation2 + $0x48] sm:$0xff] %vm80, 0.0
      %91 = vst.msk [vmem:[#allocation2 + $0x50] sm:$0xff] %vm80, 0.0
      %92 = vst.msk [vmem:[#allocation2 + $0x58] sm:$0xff] %vm80, 0.0
      %93 = vst.msk [vmem:[#allocation2 + $0x60] sm:$0xff] %vm80, 0.0
      %94 = vst.msk [vmem:[#allocation2 + $0x68] sm:$0xff] %vm80, 0.0
      %95 = vst.msk [vmem:[#allocation2 + $0x70] sm:$0xff] %vm80, 0.0
      %96 = vst.msk [vmem:[#allocation2 + $0x78] sm:$0xff] %vm80, 0.0
      %97 = vst.msk [vmem:[#allocation2 + $0x80] sm:$0xff] %vm80, 0.0
      %98 = vst.msk [vmem:[#allocation2 + $0x88] sm:$0xff] %vm80, 0.0
      %99 = vst.msk [vmem:[#allocation2 + $0x90] sm:$0xff] %vm80, 0.0
      %100 = vst.msk [vmem:[#allocation2 + $0x98] sm:$0xff] %vm80, 0.0
      %101 = vst.msk [vmem:[#allocation2 + $0xa0] sm:$0xff] %vm80, 0.0
      %102 = vst.msk [vmem:[#allocation2 + $0xa8] sm:$0xff] %vm80, 0.0
      %103 = vst.msk [vmem:[#allocation2 + $0xb0] sm:$0xff] %vm80, 0.0
      %104 = vst.msk [vmem:[#allocation2 + $0xb8] sm:$0xff] %vm80, 0.0
      %105 = vst.msk [vmem:[#allocation2 + $0xc0] sm:$0xff] %vm80, 0.0
      %106 = vst.msk [vmem:[#allocation2 + $0xc8] sm:$0xff] %vm80, 0.0
      %107 = vst.msk [vmem:[#allocation2 + $0xd0] sm:$0xff] %vm80, 0.0
      %108 = vst.msk [vmem:[#allocation2 + $0xd8] sm:$0xff] %vm80, 0.0
      %109 = vst.msk [vmem:[#allocation2 + $0xe0] sm:$0xff] %vm80, 0.0
      %110 = vst.msk [vmem:[#allocation2 + $0xe8] sm:$0xff] %vm80, 0.0
      %111 = vst.msk [vmem:[#allocation2 + $0xf0] sm:$0xff] %vm80, 0.0
      %112 = vst.msk [vmem:[#allocation2 + $0xf8] sm:$0xff] %vm80, 0.0
      %113 = vst.msk [vmem:[#allocation2 + $0x100] sm:$0xff] %vm80, 0.0
      %114 = vst.msk [vmem:[#allocation2 + $0x108] sm:$0xff] %vm80, 0.0
      %115 = vst.msk [vmem:[#allocation2 + $0x110] sm:$0xff] %vm80, 0.0
      %116 = vst.msk [vmem:[#allocation2 + $0x118] sm:$0xff] %vm80, 0.0
      %117 = vst.msk [vmem:[#allocation2 + $0x120] sm:$0xff] %vm80, 0.0
      %118 = vst.msk [vmem:[#allocation2 + $0x128] sm:$0xff] %vm80, 0.0
      %119 = vst.msk [vmem:[#allocation3] sm:$0xff] %vm80, 0.0
      %120 = vst.msk [vmem:[#allocation3 + $0x8] sm:$0xff] %vm80, 0.0
      %121 = vst.msk [vmem:[#allocation3 + $0x10] sm:$0xff] %vm80, 0.0
      %122 = vst.msk [vmem:[#allocation3 + $0x18] sm:$0xff] %vm80, 0.0
      %123 = vst.msk [vmem:[#allocation3 + $0x20] sm:$0xff] %vm80, 0.0
      %124 = vst.msk [vmem:[#allocation3 + $0x28] sm:$0xff] %vm80, 0.0
      %125 = vst.msk [vmem:[#allocation3 + $0x30] sm:$0xff] %vm80, 0.0
      %126 = vst.msk [vmem:[#allocation3 + $0x38] sm:$0xff] %vm80, 0.0
      %127 = vst.msk [vmem:[#allocation3 + $0x40] sm:$0xff] %vm80, 0.0
      %128 = vst.msk [vmem:[#allocation3 + $0x48] sm:$0xff] %vm80, 0.0
      %129 = vst.msk [vmem:[#allocation3 + $0x50] sm:$0xff] %vm80, 0.0
      %130 = vst.msk [vmem:[#allocation3 + $0x58] sm:$0xff] %vm80, 0.0
      %131 = vst.msk [vmem:[#allocation3 + $0x60] sm:$0xff] %vm80, 0.0
      %132 = vst.msk [vmem:[#allocation3 + $0x68] sm:$0xff] %vm80, 0.0
      %133 = vst.msk [vmem:[#allocation3 + $0x70] sm:$0xff] %vm80, 0.0
      %134 = vst.msk [vmem:[#allocation3 + $0x78] sm:$0xff] %vm80, 0.0
      %135 = vst.msk [vmem:[#allocation3 + $0x80] sm:$0xff] %vm80, 0.0
      %136 = vst.msk [vmem:[#allocation3 + $0x88] sm:$0xff] %vm80, 0.0
      %137 = vst.msk [vmem:[#allocation3 + $0x90] sm:$0xff] %vm80, 0.0
      %138 = vst.msk [vmem:[#allocation3 + $0x98] sm:$0xff] %vm80, 0.0
      %139 = vst.msk [vmem:[#allocation3 + $0xa0] sm:$0xff] %vm80, 0.0
      %140 = vst.msk [vmem:[#allocation3 + $0xa8] sm:$0xff] %vm80, 0.0
      %141 = vst.msk [vmem:[#allocation3 + $0xb0] sm:$0xff] %vm80, 0.0
      %142 = vst.msk [vmem:[#allocation3 + $0xb8] sm:$0xff] %vm80, 0.0
      %143 = vst.msk [vmem:[#allocation3 + $0xc0] sm:$0xff] %vm80, 0.0
      %144 = vst.msk [vmem:[#allocation3 + $0xc8] sm:$0xff] %vm80, 0.0
      %145 = vst.msk [vmem:[#allocation3 + $0xd0] sm:$0xff] %vm80, 0.0
      %146 = vst.msk [vmem:[#allocation3 + $0xd8] sm:$0xff] %vm80, 0.0
      %147 = vst.msk [vmem:[#allocation3 + $0xe0] sm:$0xff] %vm80, 0.0
      %148 = vst.msk [vmem:[#allocation3 + $0xe8] sm:$0xff] %vm80, 0.0
      %149 = vst.msk [vmem:[#allocation3 + $0xf0] sm:$0xff] %vm80, 0.0
      %150 = vst.msk [vmem:[#allocation3 + $0xf8] sm:$0xff] %vm80, 0.0
      %151 = vst.msk [vmem:[#allocation3 + $0x100] sm:$0xff] %vm80, 0.0
      %152 = vst.msk [vmem:[#allocation3 + $0x108] sm:$0xff] %vm80, 0.0
      %153 = vst.msk [vmem:[#allocation3 + $0x110] sm:$0xff] %vm80, 0.0
      %154 = vst.msk [vmem:[#allocation3 + $0x118] sm:$0xff] %vm80, 0.0
      %155 = vst.msk [vmem:[#allocation3 + $0x120] sm:$0xff] %vm80, 0.0
      %156 = vst.msk [vmem:[#allocation3 + $0x128] sm:$0xff] %vm80, 0.0
    $region13: #{tpu_custom_call.1} parent=1 // pred_fallthru
      _
    %v157 = vld [vmem:[%s59] sm:$0xff]
    %v158 = vld [vmem:[%s59 + $0x8] sm:$0xff]
    %v159 = vld [vmem:[%s59 + $0x10] sm:$0xff]
    %v160 = vld [vmem:[%s59 + $0x18] sm:$0xff]
    %v161 = vld [vmem:[%s59 + $0x20] sm:$0xff]
    %v162 = vld [vmem:[%s59 + $0x28] sm:$0xff]
    %v163 = vld [vmem:[%s59 + $0x30] sm:$0xff]
    %v164 = vld [vmem:[%s59 + $0x38] sm:$0xff]
    %v165 = vld [vmem:[%s59 + $0x40] sm:$0xff]
    %v166 = vld [vmem:[%s59 + $0x48] sm:$0xff]
    %v167 = vld [vmem:[%s59 + $0x50] sm:$0xff]
    %v168 = vld [vmem:[%s59 + $0x58] sm:$0xff]
    %v169 = vld [vmem:[%s59 + $0x60] sm:$0xff]
    %v170 = vld [vmem:[%s59 + $0x68] sm:$0xff]
    %v171 = vld [vmem:[%s59 + $0x70] sm:$0xff]
    %v172 = vld [vmem:[%s59 + $0x78] sm:$0xff]
    %v173 = vld [vmem:[%s59 + $0x80] sm:$0xff]
    %v174 = vld [vmem:[%s59 + $0x88] sm:$0xff]
    %v175 = vld [vmem:[%s59 + $0x90] sm:$0xff]
    %v176 = vld [vmem:[%s59 + $0x98] sm:$0xff]
    %v177 = vld [vmem:[%s59 + $0xa0] sm:$0xff]
    %v178 = vld [vmem:[%s59 + $0xa8] sm:$0xff]
    %v179 = vld [vmem:[%s59 + $0xb0] sm:$0xff]
    %v180 = vld [vmem:[%s59 + $0xb8] sm:$0xff]
    %v181 = vld [vmem:[%s59 + $0xc0] sm:$0xff]
    %v182 = vld [vmem:[%s59 + $0xc8] sm:$0xff]
    %v183 = vld [vmem:[%s59 + $0xd0] sm:$0xff]
    %v184 = vld [vmem:[%s59 + $0xd8] sm:$0xff]
    %v185 = vld [vmem:[%s59 + $0xe0] sm:$0xff]
    %v186 = vld [vmem:[%s59 + $0xe8] sm:$0xff]
    %v187 = vld [vmem:[%s59 + $0xf0] sm:$0xff]
    %v188 = vld [vmem:[%s59 + $0xf8] sm:$0xff]
    %v189 = vld [vmem:[%s59 + $0x100] sm:$0xff]
    %v190 = vld [vmem:[%s59 + $0x108] sm:$0xff]
    %v191 = vld [vmem:[%s59 + $0x110] sm:$0xff]
    %v192 = vld [vmem:[%s59 + $0x118] sm:$0xff]
    %v193 = vld [vmem:[%s59 + $0x120] sm:$0xff]
    %v194 = vld [vmem:[%s59 + $0x128] sm:$0xff]
    %v195 = vld [vmem:[%s71] sm:$0xff]
    %v196 = vld [vmem:[%s71 + $0x8] sm:$0xff]
    %v197 = vld [vmem:[%s71 + $0x10] sm:$0xff]
    %v198 = vld [vmem:[%s71 + $0x18] sm:$0xff]
    %v199 = vld [vmem:[%s71 + $0x20] sm:$0xff]
    %v200 = vld [vmem:[%s71 + $0x28] sm:$0xff]
    %v201 = vld [vmem:[%s71 + $0x30] sm:$0xff]
    %v202 = vld [vmem:[%s71 + $0x38] sm:$0xff]
    %v203 = vld [vmem:[%s71 + $0x40] sm:$0xff]
    %v204 = vld [vmem:[%s71 + $0x48] sm:$0xff]
    %v205 = vld [vmem:[%s71 + $0x50] sm:$0xff]
    %v206 = vld [vmem:[%s71 + $0x58] sm:$0xff]
    %v207 = vld [vmem:[%s71 + $0x60] sm:$0xff]
    %v208 = vld [vmem:[%s71 + $0x68] sm:$0xff]
    %v209 = vld [vmem:[%s71 + $0x70] sm:$0xff]
    %v210 = vld [vmem:[%s71 + $0x78] sm:$0xff]
    %v211 = vld [vmem:[%s71 + $0x80] sm:$0xff]
    %v212 = vld [vmem:[%s71 + $0x88] sm:$0xff]
    %v213 = vld [vmem:[%s71 + $0x90] sm:$0xff]
    %v214 = vld [vmem:[%s71 + $0x98] sm:$0xff]
    %v215 = vld [vmem:[%s71 + $0xa0] sm:$0xff]
    %v216 = vld [vmem:[%s71 + $0xa8] sm:$0xff]
    %v217 = vld [vmem:[%s71 + $0xb0] sm:$0xff]
    %v218 = vld [vmem:[%s71 + $0xb8] sm:$0xff]
    %v219 = vld [vmem:[%s71 + $0xc0] sm:$0xff]
    %v220 = vld [vmem:[%s71 + $0xc8] sm:$0xff]
    %v221 = vld [vmem:[%s71 + $0xd0] sm:$0xff]
    %v222 = vld [vmem:[%s71 + $0xd8] sm:$0xff]
    %v223 = vld [vmem:[%s71 + $0xe0] sm:$0xff]
    %v224 = vld [vmem:[%s71 + $0xe8] sm:$0xff]
    %v225 = vld [vmem:[%s71 + $0xf0] sm:$0xff]
    %v226 = vld [vmem:[%s71 + $0xf8] sm:$0xff]
    %v227 = vld [vmem:[%s71 + $0x100] sm:$0xff]
    %v228 = vld [vmem:[%s71 + $0x108] sm:$0xff]
    %v229 = vld [vmem:[%s71 + $0x110] sm:$0xff]
    %v230 = vld [vmem:[%s71 + $0x118] sm:$0xff]
    %v231 = vld [vmem:[%s71 + $0x120] sm:$0xff]
    %v232 = vld [vmem:[%s71 + $0x128] sm:$0xff]
    %s233 = sadd.s32 0, 0
    %s234 = smul.u32 %s233, 304
    %v235 = vlaneseq
    %v236 = vshrl.u32 %v235, 7
    %v237 = vadd.s32 %v236, 8
    %v238 = vadd.s32 %v236, 16
    %v239 = vadd.s32 %v236, 24
    %v240 = vadd.s32 %v236, 32
    %v241 = vadd.s32 %v236, 40
    %v242 = vadd.s32 %v236, 48
    %v243 = vadd.s32 %v236, 56
    %v244 = vadd.s32 %v236, 64
    %v245 = vadd.s32 %v236, 72
    %v246 = vadd.s32 %v236, 80
    %v247 = vadd.s32 %v236, 88
    %v248 = vadd.s32 %v236, 96
    %v249 = vadd.s32 %v236, 104
    %v250 = vadd.s32 %v236, 112
    %v251 = vadd.s32 %v236, 120
    %v252 = vadd.s32 %v236, 128
    %v253 = vadd.s32 %v236, 136
    %v254 = vadd.s32 %v236, 144
    %v255 = vadd.s32 %v236, 152
    %v256 = vadd.s32 %v236, 160
    %v257 = vadd.s32 %v236, 168
    %v258 = vadd.s32 %v236, 176
    %v259 = vadd.s32 %v236, 184
    %v260 = vadd.s32 %v236, 192
    %v261 = vadd.s32 %v236, 200
    %v262 = vadd.s32 %v236, 208
    %v263 = vadd.s32 %v236, 216
    %v264 = vadd.s32 %v236, 224
    %v265 = vadd.s32 %v236, 232
    %v266 = vadd.s32 %v236, 240
    %v267 = vadd.s32 %v236, 248
    %v268 = vadd.s32 %v236, 256
    %v269 = vadd.s32 %v236, 264
    %v270 = vadd.s32 %v236, 272
    %v271 = vadd.s32 %v236, 280
    %v272 = vadd.s32 %v236, 288
    %v273 = vadd.s32 %v236, 296
    %v274 = vstv %s234
    %v275 = vadd.s32 %v274, %v236
    %v276 = vadd.s32 %v274, %v237
    %v277 = vadd.s32 %v274, %v238
    %v278 = vadd.s32 %v274, %v239
    %v279 = vadd.s32 %v274, %v240
    %v280 = vadd.s32 %v274, %v241
    %v281 = vadd.s32 %v274, %v242
    %v282 = vadd.s32 %v274, %v243
    %v283 = vadd.s32 %v274, %v244
    %v284 = vadd.s32 %v274, %v245
    %v285 = vadd.s32 %v274, %v246
    %v286 = vadd.s32 %v274, %v247
    %v287 = vadd.s32 %v274, %v248
    %v288 = vadd.s32 %v274, %v249
    %v289 = vadd.s32 %v274, %v250
    %v290 = vadd.s32 %v274, %v251
    %v291 = vadd.s32 %v274, %v252
    %v292 = vadd.s32 %v274, %v253
    %v293 = vadd.s32 %v274, %v254
    %v294 = vadd.s32 %v274, %v255
    %v295 = vadd.s32 %v274, %v256
    %v296 = vadd.s32 %v274, %v257
    %v297 = vadd.s32 %v274, %v258
    %v298 = vadd.s32 %v274, %v259
    %v299 = vadd.s32 %v274, %v260
    %v300 = vadd.s32 %v274, %v261
    %v301 = vadd.s32 %v274, %v262
    %v302 = vadd.s32 %v274, %v263
    %v303 = vadd.s32 %v274, %v264
    %v304 = vadd.s32 %v274, %v265
    %v305 = vadd.s32 %v274, %v266
    %v306 = vadd.s32 %v274, %v267
    %v307 = vadd.s32 %v274, %v268
    %v308 = vadd.s32 %v274, %v269
    %v309 = vadd.s32 %v274, %v270
    %v310 = vadd.s32 %v274, %v271
    %v311 = vadd.s32 %v274, %v272
    %v312 = vadd.s32 %v274, %v273
    %vm313 = vcmp.lt.s32.totalorder %v275, 300
    %vm314 = vcmp.lt.s32.totalorder %v276, 300
    %vm315 = vcmp.lt.s32.totalorder %v277, 300
    %vm316 = vcmp.lt.s32.totalorder %v278, 300
    %vm317 = vcmp.lt.s32.totalorder %v279, 300
    %vm318 = vcmp.lt.s32.totalorder %v280, 300
    %vm319 = vcmp.lt.s32.totalorder %v281, 300
    %vm320 = vcmp.lt.s32.totalorder %v282, 300
    %vm321 = vcmp.lt.s32.totalorder %v283, 300
    %vm322 = vcmp.lt.s32.totalorder %v284, 300
    %vm323 = vcmp.lt.s32.totalorder %v285, 300
    %vm324 = vcmp.lt.s32.totalorder %v286, 300
    %vm325 = vcmp.lt.s32.totalorder %v287, 300
    %vm326 = vcmp.lt.s32.totalorder %v288, 300
    %vm327 = vcmp.lt.s32.totalorder %v289, 300
    %vm328 = vcmp.lt.s32.totalorder %v290, 300
    %vm329 = vcmp.lt.s32.totalorder %v291, 300
    %vm330 = vcmp.lt.s32.totalorder %v292, 300
    %vm331 = vcmp.lt.s32.totalorder %v293, 300
    %vm332 = vcmp.lt.s32.totalorder %v294, 300
    %vm333 = vcmp.lt.s32.totalorder %v295, 300
    %vm334 = vcmp.lt.s32.totalorder %v296, 300
    %vm335 = vcmp.lt.s32.totalorder %v297, 300
    %vm336 = vcmp.lt.s32.totalorder %v298, 300
    %vm337 = vcmp.lt.s32.totalorder %v299, 300
    %vm338 = vcmp.lt.s32.totalorder %v300, 300
    %vm339 = vcmp.lt.s32.totalorder %v301, 300
    %vm340 = vcmp.lt.s32.totalorder %v302, 300
    %vm341 = vcmp.lt.s32.totalorder %v303, 300
    %vm342 = vcmp.lt.s32.totalorder %v304, 300
    %vm343 = vcmp.lt.s32.totalorder %v305, 300
    %vm344 = vcmp.lt.s32.totalorder %v306, 300
    %vm345 = vcmp.lt.s32.totalorder %v307, 300
    %vm346 = vcmp.lt.s32.totalorder %v308, 300
    %vm347 = vcmp.lt.s32.totalorder %v309, 300
    %vm348 = vcmp.lt.s32.totalorder %v310, 300
    %vm349 = vcmp.lt.s32.totalorder %v311, 300
    %vm350 = vcmp.lt.s32.totalorder %v312, 300
    %351 = vmax.xlane.f32.xlu0 %v157
    %v352 = vpop.xlane.xlu0 %351
    %353 = vmax.xlane.f32.xlu0 %v158
    %v354 = vpop.xlane.xlu0 %353
    %355 = vmax.xlane.f32.xlu0 %v159
    %v356 = vpop.xlane.xlu0 %355
    %357 = vmax.xlane.f32.xlu0 %v160
    %v358 = vpop.xlane.xlu0 %357
    %359 = vmax.xlane.f32.xlu0 %v161
    %v360 = vpop.xlane.xlu0 %359
    %361 = vmax.xlane.f32.xlu0 %v162
    %v362 = vpop.xlane.xlu0 %361
    %363 = vmax.xlane.f32.xlu0 %v163
    %v364 = vpop.xlane.xlu0 %363
    %365 = vmax.xlane.f32.xlu0 %v164
    %v366 = vpop.xlane.xlu0 %365
    %367 = vmax.xlane.f32.xlu0 %v165
    %v368 = vpop.xlane.xlu0 %367
    %369 = vmax.xlane.f32.xlu0 %v166
    %v370 = vpop.xlane.xlu0 %369
    %371 = vmax.xlane.f32.xlu0 %v167
    %v372 = vpop.xlane.xlu0 %371
    %373 = vmax.xlane.f32.xlu0 %v168
    %v374 = vpop.xlane.xlu0 %373
    %375 = vmax.xlane.f32.xlu0 %v169
    %v376 = vpop.xlane.xlu0 %375
    %377 = vmax.xlane.f32.xlu0 %v170
    %v378 = vpop.xlane.xlu0 %377
    %379 = vmax.xlane.f32.xlu0 %v171
    %v380 = vpop.xlane.xlu0 %379
    %381 = vmax.xlane.f32.xlu0 %v172
    %v382 = vpop.xlane.xlu0 %381
    %383 = vmax.xlane.f32.xlu0 %v173
    %v384 = vpop.xlane.xlu0 %383
    %385 = vmax.xlane.f32.xlu0 %v174
    %v386 = vpop.xlane.xlu0 %385
    %387 = vmax.xlane.f32.xlu0 %v175
    %v388 = vpop.xlane.xlu0 %387
    %389 = vmax.xlane.f32.xlu0 %v176
    %v390 = vpop.xlane.xlu0 %389
    %391 = vmax.xlane.f32.xlu0 %v177
    %v392 = vpop.xlane.xlu0 %391
    %393 = vmax.xlane.f32.xlu0 %v178
    %v394 = vpop.xlane.xlu0 %393
    %395 = vmax.xlane.f32.xlu0 %v179
    %v396 = vpop.xlane.xlu0 %395
    %397 = vmax.xlane.f32.xlu0 %v180
    %v398 = vpop.xlane.xlu0 %397
    %399 = vmax.xlane.f32.xlu0 %v181
    %v400 = vpop.xlane.xlu0 %399
    %401 = vmax.xlane.f32.xlu0 %v182
    %v402 = vpop.xlane.xlu0 %401
    %403 = vmax.xlane.f32.xlu0 %v183
    %v404 = vpop.xlane.xlu0 %403
    %405 = vmax.xlane.f32.xlu0 %v184
    %v406 = vpop.xlane.xlu0 %405
    %407 = vmax.xlane.f32.xlu0 %v185
    %v408 = vpop.xlane.xlu0 %407
    %409 = vmax.xlane.f32.xlu0 %v186
    %v410 = vpop.xlane.xlu0 %409
    %411 = vmax.xlane.f32.xlu0 %v187
    %v412 = vpop.xlane.xlu0 %411
    %413 = vmax.xlane.f32.xlu0 %v188
    %v414 = vpop.xlane.xlu0 %413
    %415 = vmax.xlane.f32.xlu0 %v189
    %v416 = vpop.xlane.xlu0 %415
    %417 = vmax.xlane.f32.xlu0 %v190
    %v418 = vpop.xlane.xlu0 %417
    %419 = vmax.xlane.f32.xlu0 %v191
    %v420 = vpop.xlane.xlu0 %419
    %421 = vmax.xlane.f32.xlu0 %v192
    %v422 = vpop.xlane.xlu0 %421
    %423 = vmax.xlane.f32.xlu0 %v193
    %v424 = vpop.xlane.xlu0 %423
    %425 = vmax.xlane.f32.xlu0 %v194
    %v426 = vpop.xlane.xlu0 %425
    %v427 = vsub.f32 %v157, %v352
    %v428 = vsub.f32 %v158, %v354
    %v429 = vsub.f32 %v159, %v356
    %v430 = vsub.f32 %v160, %v358
    %v431 = vsub.f32 %v161, %v360
    %v432 = vsub.f32 %v162, %v362
    %v433 = vsub.f32 %v163, %v364
    %v434 = vsub.f32 %v164, %v366
    %v435 = vsub.f32 %v165, %v368
    %v436 = vsub.f32 %v166, %v370
    %v437 = vsub.f32 %v167, %v372
    %v438 = vsub.f32 %v168, %v374
    %v439 = vsub.f32 %v169, %v376
    %v440 = vsub.f32 %v170, %v378
    %v441 = vsub.f32 %v171, %v380
    %v442 = vsub.f32 %v172, %v382
    %v443 = vsub.f32 %v173, %v384
    %v444 = vsub.f32 %v174, %v386
    %v445 = vsub.f32 %v175, %v388
    %v446 = vsub.f32 %v176, %v390
    %v447 = vsub.f32 %v177, %v392
    %v448 = vsub.f32 %v178, %v394
    %v449 = vsub.f32 %v179, %v396
    %v450 = vsub.f32 %v180, %v398
    %v451 = vsub.f32 %v181, %v400
    %v452 = vsub.f32 %v182, %v402
    %v453 = vsub.f32 %v183, %v404
    %v454 = vsub.f32 %v184, %v406
    %v455 = vsub.f32 %v185, %v408
    %v456 = vsub.f32 %v186, %v410
    %v457 = vsub.f32 %v187, %v412
    %v458 = vsub.f32 %v188, %v414
    %v459 = vsub.f32 %v189, %v416
    %v460 = vsub.f32 %v190, %v418
    %v461 = vsub.f32 %v191, %v420
    %v462 = vsub.f32 %v192, %v422
    %v463 = vsub.f32 %v193, %v424
    %v464 = vsub.f32 %v194, %v426
    %v465 = vmul.f32 %v427, 1.442695
    %v466 = vpow.pop %v465
    %v467 = vmul.f32 %v428, 1.442695
    %v468 = vpow.pop %v467
    %v469 = vmul.f32 %v429, 1.442695
    %v470 = vpow.pop %v469
    %v471 = vmul.f32 %v430, 1.442695
    %v472 = vpow.pop %v471
    %v473 = vmul.f32 %v431, 1.442695
    %v474 = vpow.pop %v473
    %v475 = vmul.f32 %v432, 1.442695
    %v476 = vpow.pop %v475
    %v477 = vmul.f32 %v433, 1.442695
    %v478 = vpow.pop %v477
    %v479 = vmul.f32 %v434, 1.442695
    %v480 = vpow.pop %v479
    %v481 = vmul.f32 %v435, 1.442695
    %v482 = vpow.pop %v481
    %v483 = vmul.f32 %v436, 1.442695
    %v484 = vpow.pop %v483
    %v485 = vmul.f32 %v437, 1.442695
    %v486 = vpow.pop %v485
    %v487 = vmul.f32 %v438, 1.442695
    %v488 = vpow.pop %v487
    %v489 = vmul.f32 %v439, 1.442695
    %v490 = vpow.pop %v489
    %v491 = vmul.f32 %v440, 1.442695
    %v492 = vpow.pop %v491
    %v493 = vmul.f32 %v441, 1.442695
    %v494 = vpow.pop %v493
    %v495 = vmul.f32 %v442, 1.442695
    %v496 = vpow.pop %v495
    %v497 = vmul.f32 %v443, 1.442695
    %v498 = vpow.pop %v497
    %v499 = vmul.f32 %v444, 1.442695
    %v500 = vpow.pop %v499
    %v501 = vmul.f32 %v445, 1.442695
    %v502 = vpow.pop %v501
    %v503 = vmul.f32 %v446, 1.442695
    %v504 = vpow.pop %v503
    %v505 = vmul.f32 %v447, 1.442695
    %v506 = vpow.pop %v505
    %v507 = vmul.f32 %v448, 1.442695
    %v508 = vpow.pop %v507
    %v509 = vmul.f32 %v449, 1.442695
    %v510 = vpow.pop %v509
    %v511 = vmul.f32 %v450, 1.442695
    %v512 = vpow.pop %v511
    %v513 = vmul.f32 %v451, 1.442695
    %v514 = vpow.pop %v513
    %v515 = vmul.f32 %v452, 1.442695
    %v516 = vpow.pop %v515
    %v517 = vmul.f32 %v453, 1.442695
    %v518 = vpow.pop %v517
    %v519 = vmul.f32 %v454, 1.442695
    %v520 = vpow.pop %v519
    %v521 = vmul.f32 %v455, 1.442695
    %v522 = vpow.pop %v521
    %v523 = vmul.f32 %v456, 1.442695
    %v524 = vpow.pop %v523
    %v525 = vmul.f32 %v457, 1.442695
    %v526 = vpow.pop %v525
    %v527 = vmul.f32 %v458, 1.442695
    %v528 = vpow.pop %v527
    %v529 = vmul.f32 %v459, 1.442695
    %v530 = vpow.pop %v529
    %v531 = vmul.f32 %v460, 1.442695
    %v532 = vpow.pop %v531
    %v533 = vmul.f32 %v461, 1.442695
    %v534 = vpow.pop %v533
    %v535 = vmul.f32 %v462, 1.442695
    %v536 = vpow.pop %v535
    %v537 = vmul.f32 %v463, 1.442695
    %v538 = vpow.pop %v537
    %v539 = vmul.f32 %v464, 1.442695
    %v540 = vpow.pop %v539
    %541 = vadd.xlane.f32.xlu0 %v466
    %v542 = vpop.xlane.xlu0 %541
    %543 = vadd.xlane.f32.xlu0 %v468
    %v544 = vpop.xlane.xlu0 %543
    %545 = vadd.xlane.f32.xlu0 %v470
    %v546 = vpop.xlane.xlu0 %545
    %547 = vadd.xlane.f32.xlu0 %v472
    %v548 = vpop.xlane.xlu0 %547
    %549 = vadd.xlane.f32.xlu0 %v474
    %v550 = vpop.xlane.xlu0 %549
    %551 = vadd.xlane.f32.xlu0 %v476
    %v552 = vpop.xlane.xlu0 %551
    %553 = vadd.xlane.f32.xlu0 %v478
    %v554 = vpop.xlane.xlu0 %553
    %555 = vadd.xlane.f32.xlu0 %v480
    %v556 = vpop.xlane.xlu0 %555
    %557 = vadd.xlane.f32.xlu0 %v482
    %v558 = vpop.xlane.xlu0 %557
    %559 = vadd.xlane.f32.xlu0 %v484
    %v560 = vpop.xlane.xlu0 %559
    %561 = vadd.xlane.f32.xlu0 %v486
    %v562 = vpop.xlane.xlu0 %561
    %563 = vadd.xlane.f32.xlu0 %v488
    %v564 = vpop.xlane.xlu0 %563
    %565 = vadd.xlane.f32.xlu0 %v490
    %v566 = vpop.xlane.xlu0 %565
    %567 = vadd.xlane.f32.xlu0 %v492
    %v568 = vpop.xlane.xlu0 %567
    %569 = vadd.xlane.f32.xlu0 %v494
    %v570 = vpop.xlane.xlu0 %569
    %571 = vadd.xlane.f32.xlu0 %v496
    %v572 = vpop.xlane.xlu0 %571
    %573 = vadd.xlane.f32.xlu0 %v498
    %v574 = vpop.xlane.xlu0 %573
    %575 = vadd.xlane.f32.xlu0 %v500
    %v576 = vpop.xlane.xlu0 %575
    %577 = vadd.xlane.f32.xlu0 %v502
    %v578 = vpop.xlane.xlu0 %577
    %579 = vadd.xlane.f32.xlu0 %v504
    %v580 = vpop.xlane.xlu0 %579
    %581 = vadd.xlane.f32.xlu0 %v506
    %v582 = vpop.xlane.xlu0 %581
    %583 = vadd.xlane.f32.xlu0 %v508
    %v584 = vpop.xlane.xlu0 %583
    %585 = vadd.xlane.f32.xlu0 %v510
    %v586 = vpop.xlane.xlu0 %585
    %587 = vadd.xlane.f32.xlu0 %v512
    %v588 = vpop.xlane.xlu0 %587
    %589 = vadd.xlane.f32.xlu0 %v514
    %v590 = vpop.xlane.xlu0 %589
    %591 = vadd.xlane.f32.xlu0 %v516
    %v592 = vpop.xlane.xlu0 %591
    %593 = vadd.xlane.f32.xlu0 %v518
    %v594 = vpop.xlane.xlu0 %593
    %595 = vadd.xlane.f32.xlu0 %v520
    %v596 = vpop.xlane.xlu0 %595
    %597 = vadd.xlane.f32.xlu0 %v522
    %v598 = vpop.xlane.xlu0 %597
    %599 = vadd.xlane.f32.xlu0 %v524
    %v600 = vpop.xlane.xlu0 %599
    %601 = vadd.xlane.f32.xlu0 %v526
    %v602 = vpop.xlane.xlu0 %601
    %603 = vadd.xlane.f32.xlu0 %v528
    %v604 = vpop.xlane.xlu0 %603
    %605 = vadd.xlane.f32.xlu0 %v530
    %v606 = vpop.xlane.xlu0 %605
    %607 = vadd.xlane.f32.xlu0 %v532
    %v608 = vpop.xlane.xlu0 %607
    %609 = vadd.xlane.f32.xlu0 %v534
    %v610 = vpop.xlane.xlu0 %609
    %611 = vadd.xlane.f32.xlu0 %v536
    %v612 = vpop.xlane.xlu0 %611
    %613 = vadd.xlane.f32.xlu0 %v538
    %v614 = vpop.xlane.xlu0 %613
    %615 = vadd.xlane.f32.xlu0 %v540
    %v616 = vpop.xlane.xlu0 %615
    %v617 = vlaneseq
    %v618 = vand.u32 %v617, 127
    %619 = vset.pattern.permute.xlu0 0
    %620 = vperm.xlu0 %619, %v195
    %v621 = vpop.permute.xlu0 %620
    %622 = vset.pattern.permute.xlu0 0
    %623 = vperm.xlu0 %622, %v196
    %v624 = vpop.permute.xlu0 %623
    %625 = vset.pattern.permute.xlu0 0
    %626 = vperm.xlu0 %625, %v197
    %v627 = vpop.permute.xlu0 %626
    %628 = vset.pattern.permute.xlu0 0
    %629 = vperm.xlu0 %628, %v198
    %v630 = vpop.permute.xlu0 %629
    %631 = vset.pattern.permute.xlu0 0
    %632 = vperm.xlu0 %631, %v199
    %v633 = vpop.permute.xlu0 %632
    %634 = vset.pattern.permute.xlu0 0
    %635 = vperm.xlu0 %634, %v200
    %v636 = vpop.permute.xlu0 %635
    %637 = vset.pattern.permute.xlu0 0
    %638 = vperm.xlu0 %637, %v201
    %v639 = vpop.permute.xlu0 %638
    %640 = vset.pattern.permute.xlu0 0
    %641 = vperm.xlu0 %640, %v202
    %v642 = vpop.permute.xlu0 %641
    %643 = vset.pattern.permute.xlu0 0
    %644 = vperm.xlu0 %643, %v203
    %v645 = vpop.permute.xlu0 %644
    %646 = vset.pattern.permute.xlu0 0
    %647 = vperm.xlu0 %646, %v204
    %v648 = vpop.permute.xlu0 %647
    %649 = vset.pattern.permute.xlu0 0
    %650 = vperm.xlu0 %649, %v205
    %v651 = vpop.permute.xlu0 %650
    %652 = vset.pattern.permute.xlu0 0
    %653 = vperm.xlu0 %652, %v206
    %v654 = vpop.permute.xlu0 %653
    %655 = vset.pattern.permute.xlu0 0
    %656 = vperm.xlu0 %655, %v207
    %v657 = vpop.permute.xlu0 %656
    %658 = vset.pattern.permute.xlu0 0
    %659 = vperm.xlu0 %658, %v208
    %v660 = vpop.permute.xlu0 %659
    %661 = vset.pattern.permute.xlu0 0
    %662 = vperm.xlu0 %661, %v209
    %v663 = vpop.permute.xlu0 %662
    %664 = vset.pattern.permute.xlu0 0
    %665 = vperm.xlu0 %664, %v210
    %v666 = vpop.permute.xlu0 %665
    %667 = vset.pattern.permute.xlu0 0
    %668 = vperm.xlu0 %667, %v211
    %v669 = vpop.permute.xlu0 %668
    %670 = vset.pattern.permute.xlu0 0
    %671 = vperm.xlu0 %670, %v212
    %v672 = vpop.permute.xlu0 %671
    %673 = vset.pattern.permute.xlu0 0
    %674 = vperm.xlu0 %673, %v213
    %v675 = vpop.permute.xlu0 %674
    %676 = vset.pattern.permute.xlu0 0
    %677 = vperm.xlu0 %676, %v214
    %v678 = vpop.permute.xlu0 %677
    %679 = vset.pattern.permute.xlu0 0
    %680 = vperm.xlu0 %679, %v215
    %v681 = vpop.permute.xlu0 %680
    %682 = vset.pattern.permute.xlu0 0
    %683 = vperm.xlu0 %682, %v216
    %v684 = vpop.permute.xlu0 %683
    %685 = vset.pattern.permute.xlu0 0
    %686 = vperm.xlu0 %685, %v217
    %v687 = vpop.permute.xlu0 %686
    %688 = vset.pattern.permute.xlu0 0
    %689 = vperm.xlu0 %688, %v218
    %v690 = vpop.permute.xlu0 %689
    %691 = vset.pattern.permute.xlu0 0
    %692 = vperm.xlu0 %691, %v219
    %v693 = vpop.permute.xlu0 %692
    %694 = vset.pattern.permute.xlu0 0
    %695 = vperm.xlu0 %694, %v220
    %v696 = vpop.permute.xlu0 %695
    %697 = vset.pattern.permute.xlu0 0
    %698 = vperm.xlu0 %697, %v221
    %v699 = vpop.permute.xlu0 %698
    %700 = vset.pattern.permute.xlu0 0
    %701 = vperm.xlu0 %700, %v222
    %v702 = vpop.permute.xlu0 %701
    %703 = vset.pattern.permute.xlu0 0
    %704 = vperm.xlu0 %703, %v223
    %v705 = vpop.permute.xlu0 %704
    %706 = vset.pattern.permute.xlu0 0
    %707 = vperm.xlu0 %706, %v224
    %v708 = vpop.permute.xlu0 %707
    %709 = vset.pattern.permute.xlu0 0
    %710 = vperm.xlu0 %709, %v225
    %v711 = vpop.permute.xlu0 %710
    %712 = vset.pattern.permute.xlu0 0
    %713 = vperm.xlu0 %712, %v226
    %v714 = vpop.permute.xlu0 %713
    %715 = vset.pattern.permute.xlu0 0
    %716 = vperm.xlu0 %715, %v227
    %v717 = vpop.permute.xlu0 %716
    %718 = vset.pattern.permute.xlu0 0
    %719 = vperm.xlu0 %718, %v228
    %v720 = vpop.permute.xlu0 %719
    %721 = vset.pattern.permute.xlu0 0
    %722 = vperm.xlu0 %721, %v229
    %v723 = vpop.permute.xlu0 %722
    %724 = vset.pattern.permute.xlu0 0
    %725 = vperm.xlu0 %724, %v230
    %v726 = vpop.permute.xlu0 %725
    %727 = vset.pattern.permute.xlu0 0
    %728 = vperm.xlu0 %727, %v231
    %v729 = vpop.permute.xlu0 %728
    %730 = vset.pattern.permute.xlu0 0
    %731 = vperm.xlu0 %730, %v232
    %v732 = vpop.permute.xlu0 %731
    %vm733 = vcmp.eq.s32.totalorder %v618, %v621
    %vm734 = vcmp.eq.s32.totalorder %v618, %v624
    %vm735 = vcmp.eq.s32.totalorder %v618, %v627
    %vm736 = vcmp.eq.s32.totalorder %v618, %v630
    %vm737 = vcmp.eq.s32.totalorder %v618, %v633
    %vm738 = vcmp.eq.s32.totalorder %v618, %v636
    %vm739 = vcmp.eq.s32.totalorder %v618, %v639
    %vm740 = vcmp.eq.s32.totalorder %v618, %v642
    %vm741 = vcmp.eq.s32.totalorder %v618, %v645
    %vm742 = vcmp.eq.s32.totalorder %v618, %v648
    %vm743 = vcmp.eq.s32.totalorder %v618, %v651
    %vm744 = vcmp.eq.s32.totalorder %v618, %v654
    %vm745 = vcmp.eq.s32.totalorder %v618, %v657
    %vm746 = vcmp.eq.s32.totalorder %v618, %v660
    %vm747 = vcmp.eq.s32.totalorder %v618, %v663
    %vm748 = vcmp.eq.s32.totalorder %v618, %v666
    %vm749 = vcmp.eq.s32.totalorder %v618, %v669
    %vm750 = vcmp.eq.s32.totalorder %v618, %v672
    %vm751 = vcmp.eq.s32.totalorder %v618, %v675
    %vm752 = vcmp.eq.s32.totalorder %v618, %v678
    %vm753 = vcmp.eq.s32.totalorder %v618, %v681
    %vm754 = vcmp.eq.s32.totalorder %v618, %v684
    %vm755 = vcmp.eq.s32.totalorder %v618, %v687
    %vm756 = vcmp.eq.s32.totalorder %v618, %v690
    %vm757 = vcmp.eq.s32.totalorder %v618, %v693
    %vm758 = vcmp.eq.s32.totalorder %v618, %v696
    %vm759 = vcmp.eq.s32.totalorder %v618, %v699
    %vm760 = vcmp.eq.s32.totalorder %v618, %v702
    %vm761 = vcmp.eq.s32.totalorder %v618, %v705
    %vm762 = vcmp.eq.s32.totalorder %v618, %v708
    %vm763 = vcmp.eq.s32.totalorder %v618, %v711
    %vm764 = vcmp.eq.s32.totalorder %v618, %v714
    %vm765 = vcmp.eq.s32.totalorder %v618, %v717
    %vm766 = vcmp.eq.s32.totalorder %v618, %v720
    %vm767 = vcmp.eq.s32.totalorder %v618, %v723
    %vm768 = vcmp.eq.s32.totalorder %v618, %v726
    %vm769 = vcmp.eq.s32.totalorder %v618, %v729
    %vm770 = vcmp.eq.s32.totalorder %v618, %v732
    %v771 = vsel %vm733, %v427, 0.0
    %v772 = vsel %vm734, %v428, 0.0
    %v773 = vsel %vm735, %v429, 0.0
    %v774 = vsel %vm736, %v430, 0.0
    %v775 = vsel %vm737, %v431, 0.0
    %v776 = vsel %vm738, %v432, 0.0
    %v777 = vsel %vm739, %v433, 0.0
    %v778 = vsel %vm740, %v434, 0.0
    %v779 = vsel %vm741, %v435, 0.0
    %v780 = vsel %vm742, %v436, 0.0
    %v781 = vsel %vm743, %v437, 0.0
    %v782 = vsel %vm744, %v438, 0.0
    %v783 = vsel %vm745, %v439, 0.0
    %v784 = vsel %vm746, %v440, 0.0
    %v785 = vsel %vm747, %v441, 0.0
    %v786 = vsel %vm748, %v442, 0.0
    %v787 = vsel %vm749, %v443, 0.0
    %v788 = vsel %vm750, %v444, 0.0
    %v789 = vsel %vm751, %v445, 0.0
    %v790 = vsel %vm752, %v446, 0.0
    %v791 = vsel %vm753, %v447, 0.0
    %v792 = vsel %vm754, %v448, 0.0
    %v793 = vsel %vm755, %v449, 0.0
    %v794 = vsel %vm756, %v450, 0.0
    %v795 = vsel %vm757, %v451, 0.0
    %v796 = vsel %vm758, %v452, 0.0
    %v797 = vsel %vm759, %v453, 0.0
    %v798 = vsel %vm760, %v454, 0.0
    %v799 = vsel %vm761, %v455, 0.0
    %v800 = vsel %vm762, %v456, 0.0
    %v801 = vsel %vm763, %v457, 0.0
    %v802 = vsel %vm764, %v458, 0.0
    %v803 = vsel %vm765, %v459, 0.0
    %v804 = vsel %vm766, %v460, 0.0
    %v805 = vsel %vm767, %v461, 0.0
    %v806 = vsel %vm768, %v462, 0.0
    %v807 = vsel %vm769, %v463, 0.0
    %v808 = vsel %vm770, %v464, 0.0
    %809 = vadd.xlane.f32.xlu0 %v771
    %v810 = vpop.xlane.xlu0 %809
    %811 = vadd.xlane.f32.xlu0 %v772
    %v812 = vpop.xlane.xlu0 %811
    %813 = vadd.xlane.f32.xlu0 %v773
    %v814 = vpop.xlane.xlu0 %813
    %815 = vadd.xlane.f32.xlu0 %v774
    %v816 = vpop.xlane.xlu0 %815
    %817 = vadd.xlane.f32.xlu0 %v775
    %v818 = vpop.xlane.xlu0 %817
    %819 = vadd.xlane.f32.xlu0 %v776
    %v820 = vpop.xlane.xlu0 %819
    %821 = vadd.xlane.f32.xlu0 %v777
    %v822 = vpop.xlane.xlu0 %821
    %823 = vadd.xlane.f32.xlu0 %v778
    %v824 = vpop.xlane.xlu0 %823
    %825 = vadd.xlane.f32.xlu0 %v779
    %v826 = vpop.xlane.xlu0 %825
    %827 = vadd.xlane.f32.xlu0 %v780
    %v828 = vpop.xlane.xlu0 %827
    %829 = vadd.xlane.f32.xlu0 %v781
    %v830 = vpop.xlane.xlu0 %829
    %831 = vadd.xlane.f32.xlu0 %v782
    %v832 = vpop.xlane.xlu0 %831
    %833 = vadd.xlane.f32.xlu0 %v783
    %v834 = vpop.xlane.xlu0 %833
    %835 = vadd.xlane.f32.xlu0 %v784
    %v836 = vpop.xlane.xlu0 %835
    %837 = vadd.xlane.f32.xlu0 %v785
    %v838 = vpop.xlane.xlu0 %837
    %839 = vadd.xlane.f32.xlu0 %v786
    %v840 = vpop.xlane.xlu0 %839
    %841 = vadd.xlane.f32.xlu0 %v787
    %v842 = vpop.xlane.xlu0 %841
    %843 = vadd.xlane.f32.xlu0 %v788
    %v844 = vpop.xlane.xlu0 %843
    %845 = vadd.xlane.f32.xlu0 %v789
    %v846 = vpop.xlane.xlu0 %845
    %847 = vadd.xlane.f32.xlu0 %v790
    %v848 = vpop.xlane.xlu0 %847
    %849 = vadd.xlane.f32.xlu0 %v791
    %v850 = vpop.xlane.xlu0 %849
    %851 = vadd.xlane.f32.xlu0 %v792
    %v852 = vpop.xlane.xlu0 %851
    %853 = vadd.xlane.f32.xlu0 %v793
    %v854 = vpop.xlane.xlu0 %853
    %855 = vadd.xlane.f32.xlu0 %v794
    %v856 = vpop.xlane.xlu0 %855
    %857 = vadd.xlane.f32.xlu0 %v795
    %v858 = vpop.xlane.xlu0 %857
    %859 = vadd.xlane.f32.xlu0 %v796
    %v860 = vpop.xlane.xlu0 %859
    %861 = vadd.xlane.f32.xlu0 %v797
    %v862 = vpop.xlane.xlu0 %861
    %863 = vadd.xlane.f32.xlu0 %v798
    %v864 = vpop.xlane.xlu0 %863
    %865 = vadd.xlane.f32.xlu0 %v799
    %v866 = vpop.xlane.xlu0 %865
    %867 = vadd.xlane.f32.xlu0 %v800
    %v868 = vpop.xlane.xlu0 %867
    %869 = vadd.xlane.f32.xlu0 %v801
    %v870 = vpop.xlane.xlu0 %869
    %871 = vadd.xlane.f32.xlu0 %v802
    %v872 = vpop.xlane.xlu0 %871
    %873 = vadd.xlane.f32.xlu0 %v803
    %v874 = vpop.xlane.xlu0 %873
    %875 = vadd.xlane.f32.xlu0 %v804
    %v876 = vpop.xlane.xlu0 %875
    %877 = vadd.xlane.f32.xlu0 %v805
    %v878 = vpop.xlane.xlu0 %877
    %879 = vadd.xlane.f32.xlu0 %v806
    %v880 = vpop.xlane.xlu0 %879
    %881 = vadd.xlane.f32.xlu0 %v807
    %v882 = vpop.xlane.xlu0 %881
    %883 = vadd.xlane.f32.xlu0 %v808
    %v884 = vpop.xlane.xlu0 %883
    %v885 = vlog2.pop %v542
    %v886 = vmul.f32 %v885, 0.6931472
    %v887 = vlog2.pop %v544
    %v888 = vmul.f32 %v887, 0.6931472
    %v889 = vlog2.pop %v546
    %v890 = vmul.f32 %v889, 0.6931472
    %v891 = vlog2.pop %v548
    %v892 = vmul.f32 %v891, 0.6931472
    %v893 = vlog2.pop %v550
    %v894 = vmul.f32 %v893, 0.6931472
    %v895 = vlog2.pop %v552
    %v896 = vmul.f32 %v895, 0.6931472
    %v897 = vlog2.pop %v554
    %v898 = vmul.f32 %v897, 0.6931472
    %v899 = vlog2.pop %v556
    %v900 = vmul.f32 %v899, 0.6931472
    %v901 = vlog2.pop %v558
    %v902 = vmul.f32 %v901, 0.6931472
    %v903 = vlog2.pop %v560
    %v904 = vmul.f32 %v903, 0.6931472
    %v905 = vlog2.pop %v562
    %v906 = vmul.f32 %v905, 0.6931472
    %v907 = vlog2.pop %v564
    %v908 = vmul.f32 %v907, 0.6931472
    %v909 = vlog2.pop %v566
    %v910 = vmul.f32 %v909, 0.6931472
    %v911 = vlog2.pop %v568
    %v912 = vmul.f32 %v911, 0.6931472
    %v913 = vlog2.pop %v570
    %v914 = vmul.f32 %v913, 0.6931472
    %v915 = vlog2.pop %v572
    %v916 = vmul.f32 %v915, 0.6931472
    %v917 = vlog2.pop %v574
    %v918 = vmul.f32 %v917, 0.6931472
    %v919 = vlog2.pop %v576
    %v920 = vmul.f32 %v919, 0.6931472
    %v921 = vlog2.pop %v578
    %v922 = vmul.f32 %v921, 0.6931472
    %v923 = vlog2.pop %v580
    %v924 = vmul.f32 %v923, 0.6931472
    %v925 = vlog2.pop %v582
    %v926 = vmul.f32 %v925, 0.6931472
    %v927 = vlog2.pop %v584
    %v928 = vmul.f32 %v927, 0.6931472
    %v929 = vlog2.pop %v586
    %v930 = vmul.f32 %v929, 0.6931472
    %v931 = vlog2.pop %v588
    %v932 = vmul.f32 %v931, 0.6931472
    %v933 = vlog2.pop %v590
    %v934 = vmul.f32 %v933, 0.6931472
    %v935 = vlog2.pop %v592
    %v936 = vmul.f32 %v935, 0.6931472
    %v937 = vlog2.pop %v594
    %v938 = vmul.f32 %v937, 0.6931472
    %v939 = vlog2.pop %v596
    %v940 = vmul.f32 %v939, 0.6931472
    %v941 = vlog2.pop %v598
    %v942 = vmul.f32 %v941, 0.6931472
    %v943 = vlog2.pop %v600
    %v944 = vmul.f32 %v943, 0.6931472
    %v945 = vlog2.pop %v602
    %v946 = vmul.f32 %v945, 0.6931472
    %v947 = vlog2.pop %v604
    %v948 = vmul.f32 %v947, 0.6931472
    %v949 = vlog2.pop %v606
    %v950 = vmul.f32 %v949, 0.6931472
    %v951 = vlog2.pop %v608
    %v952 = vmul.f32 %v951, 0.6931472
    %v953 = vlog2.pop %v610
    %v954 = vmul.f32 %v953, 0.6931472
    %v955 = vlog2.pop %v612
    %v956 = vmul.f32 %v955, 0.6931472
    %v957 = vlog2.pop %v614
    %v958 = vmul.f32 %v957, 0.6931472
    %v959 = vlog2.pop %v616
    %v960 = vmul.f32 %v959, 0.6931472
    %v961 = vsub.f32 %v886, %v810
    %v962 = vsub.f32 %v888, %v812
    %v963 = vsub.f32 %v890, %v814
    %v964 = vsub.f32 %v892, %v816
    %v965 = vsub.f32 %v894, %v818
    %v966 = vsub.f32 %v896, %v820
    %v967 = vsub.f32 %v898, %v822
    %v968 = vsub.f32 %v900, %v824
    %v969 = vsub.f32 %v902, %v826
    %v970 = vsub.f32 %v904, %v828
    %v971 = vsub.f32 %v906, %v830
    %v972 = vsub.f32 %v908, %v832
    %v973 = vsub.f32 %v910, %v834
    %v974 = vsub.f32 %v912, %v836
    %v975 = vsub.f32 %v914, %v838
    %v976 = vsub.f32 %v916, %v840
    %v977 = vsub.f32 %v918, %v842
    %v978 = vsub.f32 %v920, %v844
    %v979 = vsub.f32 %v922, %v846
    %v980 = vsub.f32 %v924, %v848
    %v981 = vsub.f32 %v926, %v850
    %v982 = vsub.f32 %v928, %v852
    %v983 = vsub.f32 %v930, %v854
    %v984 = vsub.f32 %v932, %v856
    %v985 = vsub.f32 %v934, %v858
    %v986 = vsub.f32 %v936, %v860
    %v987 = vsub.f32 %v938, %v862
    %v988 = vsub.f32 %v940, %v864
    %v989 = vsub.f32 %v942, %v866
    %v990 = vsub.f32 %v944, %v868
    %v991 = vsub.f32 %v946, %v870
    %v992 = vsub.f32 %v948, %v872
    %v993 = vsub.f32 %v950, %v874
    %v994 = vsub.f32 %v952, %v876
    %v995 = vsub.f32 %v954, %v878
    %v996 = vsub.f32 %v956, %v880
    %v997 = vsub.f32 %v958, %v882
    %v998 = vsub.f32 %v960, %v884
    %v999 = vrcp.pop %v542
    %v1000 = vrcp.pop %v544
    %v1001 = vrcp.pop %v546
    %v1002 = vrcp.pop %v548
    %v1003 = vrcp.pop %v550
    %v1004 = vrcp.pop %v552
    %v1005 = vrcp.pop %v554
    %v1006 = vrcp.pop %v556
    %v1007 = vrcp.pop %v558
    %v1008 = vrcp.pop %v560
    %v1009 = vrcp.pop %v562
    %v1010 = vrcp.pop %v564
    %v1011 = vrcp.pop %v566
    %v1012 = vrcp.pop %v568
    %v1013 = vrcp.pop %v570
    %v1014 = vrcp.pop %v572
    %v1015 = vrcp.pop %v574
    %v1016 = vrcp.pop %v576
    %v1017 = vrcp.pop %v578
    %v1018 = vrcp.pop %v580
    %v1019 = vrcp.pop %v582
    %v1020 = vrcp.pop %v584
    %v1021 = vrcp.pop %v586
    %v1022 = vrcp.pop %v588
    %v1023 = vrcp.pop %v590
    %v1024 = vrcp.pop %v592
    %v1025 = vrcp.pop %v594
    %v1026 = vrcp.pop %v596
    %v1027 = vrcp.pop %v598
    %v1028 = vrcp.pop %v600
    %v1029 = vrcp.pop %v602
    %v1030 = vrcp.pop %v604
    %v1031 = vrcp.pop %v606
    %v1032 = vrcp.pop %v608
    %v1033 = vrcp.pop %v610
    %v1034 = vrcp.pop %v612
    %v1035 = vrcp.pop %v614
    %v1036 = vrcp.pop %v616
    %v1037 = vmul.f32 %v466, %v999
    %v1038 = vmul.f32 %v468, %v1000
    %v1039 = vmul.f32 %v470, %v1001
    %v1040 = vmul.f32 %v472, %v1002
    %v1041 = vmul.f32 %v474, %v1003
    %v1042 = vmul.f32 %v476, %v1004
    %v1043 = vmul.f32 %v478, %v1005
    %v1044 = vmul.f32 %v480, %v1006
    %v1045 = vmul.f32 %v482, %v1007
    %v1046 = vmul.f32 %v484, %v1008
    %v1047 = vmul.f32 %v486, %v1009
    %v1048 = vmul.f32 %v488, %v1010
    %v1049 = vmul.f32 %v490, %v1011
    %v1050 = vmul.f32 %v492, %v1012
    %v1051 = vmul.f32 %v494, %v1013
    %v1052 = vmul.f32 %v496, %v1014
    %v1053 = vmul.f32 %v498, %v1015
    %v1054 = vmul.f32 %v500, %v1016
    %v1055 = vmul.f32 %v502, %v1017
    %v1056 = vmul.f32 %v504, %v1018
    %v1057 = vmul.f32 %v506, %v1019
    %v1058 = vmul.f32 %v508, %v1020
    %v1059 = vmul.f32 %v510, %v1021
    %v1060 = vmul.f32 %v512, %v1022
    %v1061 = vmul.f32 %v514, %v1023
    %v1062 = vmul.f32 %v516, %v1024
    %v1063 = vmul.f32 %v518, %v1025
    %v1064 = vmul.f32 %v520, %v1026
    %v1065 = vmul.f32 %v522, %v1027
    %v1066 = vmul.f32 %v524, %v1028
    %v1067 = vmul.f32 %v526, %v1029
    %v1068 = vmul.f32 %v528, %v1030
    %v1069 = vmul.f32 %v530, %v1031
    %v1070 = vmul.f32 %v532, %v1032
    %v1071 = vmul.f32 %v534, %v1033
    %v1072 = vmul.f32 %v536, %v1034
    %v1073 = vmul.f32 %v538, %v1035
    %v1074 = vmul.f32 %v540, %v1036
    %v1075 = vmax.f32 %v1037, 1e-07
    %v1076 = vmax.f32 %v1038, 1e-07
    %v1077 = vmax.f32 %v1039, 1e-07
    %v1078 = vmax.f32 %v1040, 1e-07
    %v1079 = vmax.f32 %v1041, 1e-07
    %v1080 = vmax.f32 %v1042, 1e-07
    %v1081 = vmax.f32 %v1043, 1e-07
    %v1082 = vmax.f32 %v1044, 1e-07
    %v1083 = vmax.f32 %v1045, 1e-07
    %v1084 = vmax.f32 %v1046, 1e-07
    %v1085 = vmax.f32 %v1047, 1e-07
    %v1086 = vmax.f32 %v1048, 1e-07
    %v1087 = vmax.f32 %v1049, 1e-07
    %v1088 = vmax.f32 %v1050, 1e-07
    %v1089 = vmax.f32 %v1051, 1e-07
    %v1090 = vmax.f32 %v1052, 1e-07
    %v1091 = vmax.f32 %v1053, 1e-07
    %v1092 = vmax.f32 %v1054, 1e-07
    %v1093 = vmax.f32 %v1055, 1e-07
    %v1094 = vmax.f32 %v1056, 1e-07
    %v1095 = vmax.f32 %v1057, 1e-07
    %v1096 = vmax.f32 %v1058, 1e-07
    %v1097 = vmax.f32 %v1059, 1e-07
    %v1098 = vmax.f32 %v1060, 1e-07
    %v1099 = vmax.f32 %v1061, 1e-07
    %v1100 = vmax.f32 %v1062, 1e-07
    %v1101 = vmax.f32 %v1063, 1e-07
    %v1102 = vmax.f32 %v1064, 1e-07
    %v1103 = vmax.f32 %v1065, 1e-07
    %v1104 = vmax.f32 %v1066, 1e-07
    %v1105 = vmax.f32 %v1067, 1e-07
    %v1106 = vmax.f32 %v1068, 1e-07
    %v1107 = vmax.f32 %v1069, 1e-07
    %v1108 = vmax.f32 %v1070, 1e-07
    %v1109 = vmax.f32 %v1071, 1e-07
    %v1110 = vmax.f32 %v1072, 1e-07
    %v1111 = vmax.f32 %v1073, 1e-07
    %v1112 = vmax.f32 %v1074, 1e-07
    %1113 = vadd.xlane.f32.xlu0 %v1075
    %v1114 = vpop.xlane.xlu0 %1113
    %1115 = vadd.xlane.f32.xlu0 %v1076
    %v1116 = vpop.xlane.xlu0 %1115
    %1117 = vadd.xlane.f32.xlu0 %v1077
    %v1118 = vpop.xlane.xlu0 %1117
    %1119 = vadd.xlane.f32.xlu0 %v1078
    %v1120 = vpop.xlane.xlu0 %1119
    %1121 = vadd.xlane.f32.xlu0 %v1079
    %v1122 = vpop.xlane.xlu0 %1121
    %1123 = vadd.xlane.f32.xlu0 %v1080
    %v1124 = vpop.xlane.xlu0 %1123
    %1125 = vadd.xlane.f32.xlu0 %v1081
    %v1126 = vpop.xlane.xlu0 %1125
    %1127 = vadd.xlane.f32.xlu0 %v1082
    %v1128 = vpop.xlane.xlu0 %1127
    %1129 = vadd.xlane.f32.xlu0 %v1083
    %v1130 = vpop.xlane.xlu0 %1129
    %1131 = vadd.xlane.f32.xlu0 %v1084
    %v1132 = vpop.xlane.xlu0 %1131
    %1133 = vadd.xlane.f32.xlu0 %v1085
    %v1134 = vpop.xlane.xlu0 %1133
    %1135 = vadd.xlane.f32.xlu0 %v1086
    %v1136 = vpop.xlane.xlu0 %1135
    %1137 = vadd.xlane.f32.xlu0 %v1087
    %v1138 = vpop.xlane.xlu0 %1137
    %1139 = vadd.xlane.f32.xlu0 %v1088
    %v1140 = vpop.xlane.xlu0 %1139
    %1141 = vadd.xlane.f32.xlu0 %v1089
    %v1142 = vpop.xlane.xlu0 %1141
    %1143 = vadd.xlane.f32.xlu0 %v1090
    %v1144 = vpop.xlane.xlu0 %1143
    %1145 = vadd.xlane.f32.xlu0 %v1091
    %v1146 = vpop.xlane.xlu0 %1145
    %1147 = vadd.xlane.f32.xlu0 %v1092
    %v1148 = vpop.xlane.xlu0 %1147
    %1149 = vadd.xlane.f32.xlu0 %v1093
    %v1150 = vpop.xlane.xlu0 %1149
    %1151 = vadd.xlane.f32.xlu0 %v1094
    %v1152 = vpop.xlane.xlu0 %1151
    %1153 = vadd.xlane.f32.xlu0 %v1095
    %v1154 = vpop.xlane.xlu0 %1153
    %1155 = vadd.xlane.f32.xlu0 %v1096
    %v1156 = vpop.xlane.xlu0 %1155
    %1157 = vadd.xlane.f32.xlu0 %v1097
    %v1158 = vpop.xlane.xlu0 %1157
    %1159 = vadd.xlane.f32.xlu0 %v1098
    %v1160 = vpop.xlane.xlu0 %1159
    %1161 = vadd.xlane.f32.xlu0 %v1099
    %v1162 = vpop.xlane.xlu0 %1161
    %1163 = vadd.xlane.f32.xlu0 %v1100
    %v1164 = vpop.xlane.xlu0 %1163
    %1165 = vadd.xlane.f32.xlu0 %v1101
    %v1166 = vpop.xlane.xlu0 %1165
    %1167 = vadd.xlane.f32.xlu0 %v1102
    %v1168 = vpop.xlane.xlu0 %1167
    %1169 = vadd.xlane.f32.xlu0 %v1103
    %v1170 = vpop.xlane.xlu0 %1169
    %1171 = vadd.xlane.f32.xlu0 %v1104
    %v1172 = vpop.xlane.xlu0 %1171
    %1173 = vadd.xlane.f32.xlu0 %v1105
    %v1174 = vpop.xlane.xlu0 %1173
    %1175 = vadd.xlane.f32.xlu0 %v1106
    %v1176 = vpop.xlane.xlu0 %1175
    %1177 = vadd.xlane.f32.xlu0 %v1107
    %v1178 = vpop.xlane.xlu0 %1177
    %1179 = vadd.xlane.f32.xlu0 %v1108
    %v1180 = vpop.xlane.xlu0 %1179
    %1181 = vadd.xlane.f32.xlu0 %v1109
    %v1182 = vpop.xlane.xlu0 %1181
    %1183 = vadd.xlane.f32.xlu0 %v1110
    %v1184 = vpop.xlane.xlu0 %1183
    %1185 = vadd.xlane.f32.xlu0 %v1111
    %v1186 = vpop.xlane.xlu0 %1185
    %1187 = vadd.xlane.f32.xlu0 %v1112
    %v1188 = vpop.xlane.xlu0 %1187
    %v1189 = vmul.f32 %v810, 1.442695
    %v1190 = vpow.pop %v1189
    %v1191 = vmul.f32 %v812, 1.442695
    %v1192 = vpow.pop %v1191
    %v1193 = vmul.f32 %v814, 1.442695
    %v1194 = vpow.pop %v1193
    %v1195 = vmul.f32 %v816, 1.442695
    %v1196 = vpow.pop %v1195
    %v1197 = vmul.f32 %v818, 1.442695
    %v1198 = vpow.pop %v1197
    %v1199 = vmul.f32 %v820, 1.442695
    %v1200 = vpow.pop %v1199
    %v1201 = vmul.f32 %v822, 1.442695
    %v1202 = vpow.pop %v1201
    %v1203 = vmul.f32 %v824, 1.442695
    %v1204 = vpow.pop %v1203
    %v1205 = vmul.f32 %v826, 1.442695
    %v1206 = vpow.pop %v1205
    %v1207 = vmul.f32 %v828, 1.442695
    %v1208 = vpow.pop %v1207
    %v1209 = vmul.f32 %v830, 1.442695
    %v1210 = vpow.pop %v1209
    %v1211 = vmul.f32 %v832, 1.442695
    %v1212 = vpow.pop %v1211
    %v1213 = vmul.f32 %v834, 1.442695
    %v1214 = vpow.pop %v1213
    %v1215 = vmul.f32 %v836, 1.442695
    %v1216 = vpow.pop %v1215
    %v1217 = vmul.f32 %v838, 1.442695
    %v1218 = vpow.pop %v1217
    %v1219 = vmul.f32 %v840, 1.442695
    %v1220 = vpow.pop %v1219
    %v1221 = vmul.f32 %v842, 1.442695
    %v1222 = vpow.pop %v1221
    %v1223 = vmul.f32 %v844, 1.442695
    %v1224 = vpow.pop %v1223
    %v1225 = vmul.f32 %v846, 1.442695
    %v1226 = vpow.pop %v1225
    %v1227 = vmul.f32 %v848, 1.442695
    %v1228 = vpow.pop %v1227
    %v1229 = vmul.f32 %v850, 1.442695
    %v1230 = vpow.pop %v1229
    %v1231 = vmul.f32 %v852, 1.442695
    %v1232 = vpow.pop %v1231
    %v1233 = vmul.f32 %v854, 1.442695
    %v1234 = vpow.pop %v1233
    %v1235 = vmul.f32 %v856, 1.442695
    %v1236 = vpow.pop %v1235
    %v1237 = vmul.f32 %v858, 1.442695
    %v1238 = vpow.pop %v1237
    %v1239 = vmul.f32 %v860, 1.442695
    %v1240 = vpow.pop %v1239
    %v1241 = vmul.f32 %v862, 1.442695
    %v1242 = vpow.pop %v1241
    %v1243 = vmul.f32 %v864, 1.442695
    %v1244 = vpow.pop %v1243
    %v1245 = vmul.f32 %v866, 1.442695
    %v1246 = vpow.pop %v1245
    %v1247 = vmul.f32 %v868, 1.442695
    %v1248 = vpow.pop %v1247
    %v1249 = vmul.f32 %v870, 1.442695
    %v1250 = vpow.pop %v1249
    %v1251 = vmul.f32 %v872, 1.442695
    %v1252 = vpow.pop %v1251
    %v1253 = vmul.f32 %v874, 1.442695
    %v1254 = vpow.pop %v1253
    %v1255 = vmul.f32 %v876, 1.442695
    %v1256 = vpow.pop %v1255
    %v1257 = vmul.f32 %v878, 1.442695
    %v1258 = vpow.pop %v1257
    %v1259 = vmul.f32 %v880, 1.442695
    %v1260 = vpow.pop %v1259
    %v1261 = vmul.f32 %v882, 1.442695
    %v1262 = vpow.pop %v1261
    %v1263 = vmul.f32 %v884, 1.442695
    %v1264 = vpow.pop %v1263
    %v1265 = vmul.f32 %v1190, %v999
    %v1266 = vmul.f32 %v1192, %v1000
    %v1267 = vmul.f32 %v1194, %v1001
    %v1268 = vmul.f32 %v1196, %v1002
    %v1269 = vmul.f32 %v1198, %v1003
    %v1270 = vmul.f32 %v1200, %v1004
    %v1271 = vmul.f32 %v1202, %v1005
    %v1272 = vmul.f32 %v1204, %v1006
    %v1273 = vmul.f32 %v1206, %v1007
    %v1274 = vmul.f32 %v1208, %v1008
    %v1275 = vmul.f32 %v1210, %v1009
    %v1276 = vmul.f32 %v1212, %v1010
    %v1277 = vmul.f32 %v1214, %v1011
    %v1278 = vmul.f32 %v1216, %v1012
    %v1279 = vmul.f32 %v1218, %v1013
    %v1280 = vmul.f32 %v1220, %v1014
    %v1281 = vmul.f32 %v1222, %v1015
    %v1282 = vmul.f32 %v1224, %v1016
    %v1283 = vmul.f32 %v1226, %v1017
    %v1284 = vmul.f32 %v1228, %v1018
    %v1285 = vmul.f32 %v1230, %v1019
    %v1286 = vmul.f32 %v1232, %v1020
    %v1287 = vmul.f32 %v1234, %v1021
    %v1288 = vmul.f32 %v1236, %v1022
    %v1289 = vmul.f32 %v1238, %v1023
    %v1290 = vmul.f32 %v1240, %v1024
    %v1291 = vmul.f32 %v1242, %v1025
    %v1292 = vmul.f32 %v1244, %v1026
    %v1293 = vmul.f32 %v1246, %v1027
    %v1294 = vmul.f32 %v1248, %v1028
    %v1295 = vmul.f32 %v1250, %v1029
    %v1296 = vmul.f32 %v1252, %v1030
    %v1297 = vmul.f32 %v1254, %v1031
    %v1298 = vmul.f32 %v1256, %v1032
    %v1299 = vmul.f32 %v1258, %v1033
    %v1300 = vmul.f32 %v1260, %v1034
    %v1301 = vmul.f32 %v1262, %v1035
    %v1302 = vmul.f32 %v1264, %v1036
    %v1303 = vmax.f32 %v1265, 1e-07
    %v1304 = vmax.f32 %v1266, 1e-07
    %v1305 = vmax.f32 %v1267, 1e-07
    %v1306 = vmax.f32 %v1268, 1e-07
    %v1307 = vmax.f32 %v1269, 1e-07
    %v1308 = vmax.f32 %v1270, 1e-07
    %v1309 = vmax.f32 %v1271, 1e-07
    %v1310 = vmax.f32 %v1272, 1e-07
    %v1311 = vmax.f32 %v1273, 1e-07
    %v1312 = vmax.f32 %v1274, 1e-07
    %v1313 = vmax.f32 %v1275, 1e-07
    %v1314 = vmax.f32 %v1276, 1e-07
    %v1315 = vmax.f32 %v1277, 1e-07
    %v1316 = vmax.f32 %v1278, 1e-07
    %v1317 = vmax.f32 %v1279, 1e-07
    %v1318 = vmax.f32 %v1280, 1e-07
    %v1319 = vmax.f32 %v1281, 1e-07
    %v1320 = vmax.f32 %v1282, 1e-07
    %v1321 = vmax.f32 %v1283, 1e-07
    %v1322 = vmax.f32 %v1284, 1e-07
    %v1323 = vmax.f32 %v1285, 1e-07
    %v1324 = vmax.f32 %v1286, 1e-07
    %v1325 = vmax.f32 %v1287, 1e-07
    %v1326 = vmax.f32 %v1288, 1e-07
    %v1327 = vmax.f32 %v1289, 1e-07
    %v1328 = vmax.f32 %v1290, 1e-07
    %v1329 = vmax.f32 %v1291, 1e-07
    %v1330 = vmax.f32 %v1292, 1e-07
    %v1331 = vmax.f32 %v1293, 1e-07
    %v1332 = vmax.f32 %v1294, 1e-07
    %v1333 = vmax.f32 %v1295, 1e-07
    %v1334 = vmax.f32 %v1296, 1e-07
    %v1335 = vmax.f32 %v1297, 1e-07
    %v1336 = vmax.f32 %v1298, 1e-07
    %v1337 = vmax.f32 %v1299, 1e-07
    %v1338 = vmax.f32 %v1300, 1e-07
    %v1339 = vmax.f32 %v1301, 1e-07
    %v1340 = vmax.f32 %v1302, 1e-07
    %v1341 = vsub.f32 %v1114, %v1303
    %v1342 = vsub.f32 %v1116, %v1304
    %v1343 = vsub.f32 %v1118, %v1305
    %v1344 = vsub.f32 %v1120, %v1306
    %v1345 = vsub.f32 %v1122, %v1307
    %v1346 = vsub.f32 %v1124, %v1308
    %v1347 = vsub.f32 %v1126, %v1309
    %v1348 = vsub.f32 %v1128, %v1310
    %v1349 = vsub.f32 %v1130, %v1311
    %v1350 = vsub.f32 %v1132, %v1312
    %v1351 = vsub.f32 %v1134, %v1313
    %v1352 = vsub.f32 %v1136, %v1314
    %v1353 = vsub.f32 %v1138, %v1315
    %v1354 = vsub.f32 %v1140, %v1316
    %v1355 = vsub.f32 %v1142, %v1317
    %v1356 = vsub.f32 %v1144, %v1318
    %v1357 = vsub.f32 %v1146, %v1319
    %v1358 = vsub.f32 %v1148, %v1320
    %v1359 = vsub.f32 %v1150, %v1321
    %v1360 = vsub.f32 %v1152, %v1322
    %v1361 = vsub.f32 %v1154, %v1323
    %v1362 = vsub.f32 %v1156, %v1324
    %v1363 = vsub.f32 %v1158, %v1325
    %v1364 = vsub.f32 %v1160, %v1326
    %v1365 = vsub.f32 %v1162, %v1327
    %v1366 = vsub.f32 %v1164, %v1328
    %v1367 = vsub.f32 %v1166, %v1329
    %v1368 = vsub.f32 %v1168, %v1330
    %v1369 = vsub.f32 %v1170, %v1331
    %v1370 = vsub.f32 %v1172, %v1332
    %v1371 = vsub.f32 %v1174, %v1333
    %v1372 = vsub.f32 %v1176, %v1334
    %v1373 = vsub.f32 %v1178, %v1335
    %v1374 = vsub.f32 %v1180, %v1336
    %v1375 = vsub.f32 %v1182, %v1337
    %v1376 = vsub.f32 %v1184, %v1338
    %v1377 = vsub.f32 %v1186, %v1339
    %v1378 = vsub.f32 %v1188, %v1340
    %v1379 = vmul.f32 %v1341, 9.2103405
    %v1380 = vmul.f32 %v1342, 9.2103405
    %v1381 = vmul.f32 %v1343, 9.2103405
    %v1382 = vmul.f32 %v1344, 9.2103405
    %v1383 = vmul.f32 %v1345, 9.2103405
    %v1384 = vmul.f32 %v1346, 9.2103405
    %v1385 = vmul.f32 %v1347, 9.2103405
    %v1386 = vmul.f32 %v1348, 9.2103405
    %v1387 = vmul.f32 %v1349, 9.2103405
    %v1388 = vmul.f32 %v1350, 9.2103405
    %v1389 = vmul.f32 %v1351, 9.2103405
    %v1390 = vmul.f32 %v1352, 9.2103405
    %v1391 = vmul.f32 %v1353, 9.2103405
    %v1392 = vmul.f32 %v1354, 9.2103405
    %v1393 = vmul.f32 %v1355, 9.2103405
    %v1394 = vmul.f32 %v1356, 9.2103405
    %v1395 = vmul.f32 %v1357, 9.2103405
    %v1396 = vmul.f32 %v1358, 9.2103405
    %v1397 = vmul.f32 %v1359, 9.2103405
    %v1398 = vmul.f32 %v1360, 9.2103405
    %v1399 = vmul.f32 %v1361, 9.2103405
    %v1400 = vmul.f32 %v1362, 9.2103405
    %v1401 = vmul.f32 %v1363, 9.2103405
    %v1402 = vmul.f32 %v1364, 9.2103405
    %v1403 = vmul.f32 %v1365, 9.2103405
    %v1404 = vmul.f32 %v1366, 9.2103405
    %v1405 = vmul.f32 %v1367, 9.2103405
    %v1406 = vmul.f32 %v1368, 9.2103405
    %v1407 = vmul.f32 %v1369, 9.2103405
    %v1408 = vmul.f32 %v1370, 9.2103405
    %v1409 = vmul.f32 %v1371, 9.2103405
    %v1410 = vmul.f32 %v1372, 9.2103405
    %v1411 = vmul.f32 %v1373, 9.2103405
    %v1412 = vmul.f32 %v1374, 9.2103405
    %v1413 = vmul.f32 %v1375, 9.2103405
    %v1414 = vmul.f32 %v1376, 9.2103405
    %v1415 = vmul.f32 %v1377, 9.2103405
    %v1416 = vmul.f32 %v1378, 9.2103405
    %v1417 = vld [vmem:[#allocation2] sm:$0xff]
    %v1418 = vld [vmem:[#allocation2 + $0x8] sm:$0xff]
    %v1419 = vld [vmem:[#allocation2 + $0x10] sm:$0xff]
    %v1420 = vld [vmem:[#allocation2 + $0x18] sm:$0xff]
    %v1421 = vld [vmem:[#allocation2 + $0x20] sm:$0xff]
    %v1422 = vld [vmem:[#allocation2 + $0x28] sm:$0xff]
    %v1423 = vld [vmem:[#allocation2 + $0x30] sm:$0xff]
    %v1424 = vld [vmem:[#allocation2 + $0x38] sm:$0xff]
    %v1425 = vld [vmem:[#allocation2 + $0x40] sm:$0xff]
    %v1426 = vld [vmem:[#allocation2 + $0x48] sm:$0xff]
    %v1427 = vld [vmem:[#allocation2 + $0x50] sm:$0xff]
    %v1428 = vld [vmem:[#allocation2 + $0x58] sm:$0xff]
    %v1429 = vld [vmem:[#allocation2 + $0x60] sm:$0xff]
    %v1430 = vld [vmem:[#allocation2 + $0x68] sm:$0xff]
    %v1431 = vld [vmem:[#allocation2 + $0x70] sm:$0xff]
    %v1432 = vld [vmem:[#allocation2 + $0x78] sm:$0xff]
    %v1433 = vld [vmem:[#allocation2 + $0x80] sm:$0xff]
    %v1434 = vld [vmem:[#allocation2 + $0x88] sm:$0xff]
    %v1435 = vld [vmem:[#allocation2 + $0x90] sm:$0xff]
    %v1436 = vld [vmem:[#allocation2 + $0x98] sm:$0xff]
    %v1437 = vld [vmem:[#allocation2 + $0xa0] sm:$0xff]
    %v1438 = vld [vmem:[#allocation2 + $0xa8] sm:$0xff]
    %v1439 = vld [vmem:[#allocation2 + $0xb0] sm:$0xff]
    %v1440 = vld [vmem:[#allocation2 + $0xb8] sm:$0xff]
    %v1441 = vld [vmem:[#allocation2 + $0xc0] sm:$0xff]
    %v1442 = vld [vmem:[#allocation2 + $0xc8] sm:$0xff]
    %v1443 = vld [vmem:[#allocation2 + $0xd0] sm:$0xff]
    %v1444 = vld [vmem:[#allocation2 + $0xd8] sm:$0xff]
    %v1445 = vld [vmem:[#allocation2 + $0xe0] sm:$0xff]
    %v1446 = vld [vmem:[#allocation2 + $0xe8] sm:$0xff]
    %v1447 = vld [vmem:[#allocation2 + $0xf0] sm:$0xff]
    %v1448 = vld [vmem:[#allocation2 + $0xf8] sm:$0xff]
    %v1449 = vld [vmem:[#allocation2 + $0x100] sm:$0xff]
    %v1450 = vld [vmem:[#allocation2 + $0x108] sm:$0xff]
    %v1451 = vld [vmem:[#allocation2 + $0x110] sm:$0xff]
    %v1452 = vld [vmem:[#allocation2 + $0x118] sm:$0xff]
    %v1453 = vld [vmem:[#allocation2 + $0x120] sm:$0xff]
    %v1454 = vld [vmem:[#allocation2 + $0x128] sm:$0xff]
    %v1455 = vsel %vm313, %v961, 0.0
    %v1456 = vsel %vm314, %v962, 0.0
    %v1457 = vsel %vm315, %v963, 0.0
    %v1458 = vsel %vm316, %v964, 0.0
    %v1459 = vsel %vm317, %v965, 0.0
    %v1460 = vsel %vm318, %v966, 0.0
    %v1461 = vsel %vm319, %v967, 0.0
    %v1462 = vsel %vm320, %v968, 0.0
    %v1463 = vsel %vm321, %v969, 0.0
    %v1464 = vsel %vm322, %v970, 0.0
    %v1465 = vsel %vm323, %v971, 0.0
    %v1466 = vsel %vm324, %v972, 0.0
    %v1467 = vsel %vm325, %v973, 0.0
    %v1468 = vsel %vm326, %v974, 0.0
    %v1469 = vsel %vm327, %v975, 0.0
    %v1470 = vsel %vm328, %v976, 0.0
    %v1471 = vsel %vm329, %v977, 0.0
    %v1472 = vsel %vm330, %v978, 0.0
    %v1473 = vsel %vm331, %v979, 0.0
    %v1474 = vsel %vm332, %v980, 0.0
    %v1475 = vsel %vm333, %v981, 0.0
    %v1476 = vsel %vm334, %v982, 0.0
    %v1477 = vsel %vm335, %v983, 0.0
    %v1478 = vsel %vm336, %v984, 0.0
    %v1479 = vsel %vm337, %v985, 0.0
    %v1480 = vsel %vm338, %v986, 0.0
    %v1481 = vsel %vm339, %v987, 0.0
    %v1482 = vsel %vm340, %v988, 0.0
    %v1483 = vsel %vm341, %v989, 0.0
    %v1484 = vsel %vm342, %v990, 0.0
    %v1485 = vsel %vm343, %v991, 0.0
    %v1486 = vsel %vm344, %v992, 0.0
    %v1487 = vsel %vm345, %v993, 0.0
    %v1488 = vsel %vm346, %v994, 0.0
    %v1489 = vsel %vm347, %v995, 0.0
    %v1490 = vsel %vm348, %v996, 0.0
    %v1491 = vsel %vm349, %v997, 0.0
    %v1492 = vsel %vm350, %v998, 0.0
    %v1493 = vadd.f32 %v1417, %v1455
    %v1494 = vadd.f32 %v1418, %v1456
    %v1495 = vadd.f32 %v1419, %v1457
    %v1496 = vadd.f32 %v1420, %v1458
    %v1497 = vadd.f32 %v1421, %v1459
    %v1498 = vadd.f32 %v1422, %v1460
    %v1499 = vadd.f32 %v1423, %v1461
    %v1500 = vadd.f32 %v1424, %v1462
    %v1501 = vadd.f32 %v1425, %v1463
    %v1502 = vadd.f32 %v1426, %v1464
    %v1503 = vadd.f32 %v1427, %v1465
    %v1504 = vadd.f32 %v1428, %v1466
    %v1505 = vadd.f32 %v1429, %v1467
    %v1506 = vadd.f32 %v1430, %v1468
    %v1507 = vadd.f32 %v1431, %v1469
    %v1508 = vadd.f32 %v1432, %v1470
    %v1509 = vadd.f32 %v1433, %v1471
    %v1510 = vadd.f32 %v1434, %v1472
    %v1511 = vadd.f32 %v1435, %v1473
    %v1512 = vadd.f32 %v1436, %v1474
    %v1513 = vadd.f32 %v1437, %v1475
    %v1514 = vadd.f32 %v1438, %v1476
    %v1515 = vadd.f32 %v1439, %v1477
    %v1516 = vadd.f32 %v1440, %v1478
    %v1517 = vadd.f32 %v1441, %v1479
    %v1518 = vadd.f32 %v1442, %v1480
    %v1519 = vadd.f32 %v1443, %v1481
    %v1520 = vadd.f32 %v1444, %v1482
    %v1521 = vadd.f32 %v1445, %v1483
    %v1522 = vadd.f32 %v1446, %v1484
    %v1523 = vadd.f32 %v1447, %v1485
    %v1524 = vadd.f32 %v1448, %v1486
    %v1525 = vadd.f32 %v1449, %v1487
    %v1526 = vadd.f32 %v1450, %v1488
    %v1527 = vadd.f32 %v1451, %v1489
    %v1528 = vadd.f32 %v1452, %v1490
    %v1529 = vadd.f32 %v1453, %v1491
    %v1530 = vadd.f32 %v1454, %v1492
    %vm1531 = vcmask 7168
    %1532 = vst.msk [vmem:[#allocation2] sm:$0xff] %vm1531, %v1493
    %1533 = vst.msk [vmem:[#allocation2 + $0x8] sm:$0xff] %vm1531, %v1494
    %1534 = vst.msk [vmem:[#allocation2 + $0x10] sm:$0xff] %vm1531, %v1495
    %1535 = vst.msk [vmem:[#allocation2 + $0x18] sm:$0xff] %vm1531, %v1496
    %1536 = vst.msk [vmem:[#allocation2 + $0x20] sm:$0xff] %vm1531, %v1497
    %1537 = vst.msk [vmem:[#allocation2 + $0x28] sm:$0xff] %vm1531, %v1498
    %1538 = vst.msk [vmem:[#allocation2 + $0x30] sm:$0xff] %vm1531, %v1499
    %1539 = vst.msk [vmem:[#allocation2 + $0x38] sm:$0xff] %vm1531, %v1500
    %1540 = vst.msk [vmem:[#allocation2 + $0x40] sm:$0xff] %vm1531, %v1501
    %1541 = vst.msk [vmem:[#allocation2 + $0x48] sm:$0xff] %vm1531, %v1502
    %1542 = vst.msk [vmem:[#allocation2 + $0x50] sm:$0xff] %vm1531, %v1503
    %1543 = vst.msk [vmem:[#allocation2 + $0x58] sm:$0xff] %vm1531, %v1504
    %1544 = vst.msk [vmem:[#allocation2 + $0x60] sm:$0xff] %vm1531, %v1505
    %1545 = vst.msk [vmem:[#allocation2 + $0x68] sm:$0xff] %vm1531, %v1506
    %1546 = vst.msk [vmem:[#allocation2 + $0x70] sm:$0xff] %vm1531, %v1507
    %1547 = vst.msk [vmem:[#allocation2 + $0x78] sm:$0xff] %vm1531, %v1508
    %1548 = vst.msk [vmem:[#allocation2 + $0x80] sm:$0xff] %vm1531, %v1509
    %1549 = vst.msk [vmem:[#allocation2 + $0x88] sm:$0xff] %vm1531, %v1510
    %1550 = vst.msk [vmem:[#allocation2 + $0x90] sm:$0xff] %vm1531, %v1511
    %1551 = vst.msk [vmem:[#allocation2 + $0x98] sm:$0xff] %vm1531, %v1512
    %1552 = vst.msk [vmem:[#allocation2 + $0xa0] sm:$0xff] %vm1531, %v1513
    %1553 = vst.msk [vmem:[#allocation2 + $0xa8] sm:$0xff] %vm1531, %v1514
    %1554 = vst.msk [vmem:[#allocation2 + $0xb0] sm:$0xff] %vm1531, %v1515
    %1555 = vst.msk [vmem:[#allocation2 + $0xb8] sm:$0xff] %vm1531, %v1516
    %1556 = vst.msk [vmem:[#allocation2 + $0xc0] sm:$0xff] %vm1531, %v1517
    %1557 = vst.msk [vmem:[#allocation2 + $0xc8] sm:$0xff] %vm1531, %v1518
    %1558 = vst.msk [vmem:[#allocation2 + $0xd0] sm:$0xff] %vm1531, %v1519
    %1559 = vst.msk [vmem:[#allocation2 + $0xd8] sm:$0xff] %vm1531, %v1520
    %1560 = vst.msk [vmem:[#allocation2 + $0xe0] sm:$0xff] %vm1531, %v1521
    %1561 = vst.msk [vmem:[#allocation2 + $0xe8] sm:$0xff] %vm1531, %v1522
    %1562 = vst.msk [vmem:[#allocation2 + $0xf0] sm:$0xff] %vm1531, %v1523
    %1563 = vst.msk [vmem:[#allocation2 + $0xf8] sm:$0xff] %vm1531, %v1524
    %1564 = vst.msk [vmem:[#allocation2 + $0x100] sm:$0xff] %vm1531, %v1525
    %1565 = vst.msk [vmem:[#allocation2 + $0x108] sm:$0xff] %vm1531, %v1526
    %1566 = vst.msk [vmem:[#allocation2 + $0x110] sm:$0xff] %vm1531, %v1527
    %1567 = vst.msk [vmem:[#allocation2 + $0x118] sm:$0xff] %vm1531, %v1528
    %1568 = vst.msk [vmem:[#allocation2 + $0x120] sm:$0xff] %vm1531, %v1529
    %1569 = vst.msk [vmem:[#allocation2 + $0x128] sm:$0xff] %vm1531, %v1530
    %v1570 = vld [vmem:[#allocation3] sm:$0xff]
    %v1571 = vld [vmem:[#allocation3 + $0x8] sm:$0xff]
    %v1572 = vld [vmem:[#allocation3 + $0x10] sm:$0xff]
    %v1573 = vld [vmem:[#allocation3 + $0x18] sm:$0xff]
    %v1574 = vld [vmem:[#allocation3 + $0x20] sm:$0xff]
    %v1575 = vld [vmem:[#allocation3 + $0x28] sm:$0xff]
    %v1576 = vld [vmem:[#allocation3 + $0x30] sm:$0xff]
    %v1577 = vld [vmem:[#allocation3 + $0x38] sm:$0xff]
    %v1578 = vld [vmem:[#allocation3 + $0x40] sm:$0xff]
    %v1579 = vld [vmem:[#allocation3 + $0x48] sm:$0xff]
    %v1580 = vld [vmem:[#allocation3 + $0x50] sm:$0xff]
    %v1581 = vld [vmem:[#allocation3 + $0x58] sm:$0xff]
    %v1582 = vld [vmem:[#allocation3 + $0x60] sm:$0xff]
    %v1583 = vld [vmem:[#allocation3 + $0x68] sm:$0xff]
    %v1584 = vld [vmem:[#allocation3 + $0x70] sm:$0xff]
    %v1585 = vld [vmem:[#allocation3 + $0x78] sm:$0xff]
    %v1586 = vld [vmem:[#allocation3 + $0x80] sm:$0xff]
    %v1587 = vld [vmem:[#allocation3 + $0x88] sm:$0xff]
    %v1588 = vld [vmem:[#allocation3 + $0x90] sm:$0xff]
    %v1589 = vld [vmem:[#allocation3 + $0x98] sm:$0xff]
    %v1590 = vld [vmem:[#allocation3 + $0xa0] sm:$0xff]
    %v1591 = vld [vmem:[#allocation3 + $0xa8] sm:$0xff]
    %v1592 = vld [vmem:[#allocation3 + $0xb0] sm:$0xff]
    %v1593 = vld [vmem:[#allocation3 + $0xb8] sm:$0xff]
    %v1594 = vld [vmem:[#allocation3 + $0xc0] sm:$0xff]
    %v1595 = vld [vmem:[#allocation3 + $0xc8] sm:$0xff]
    %v1596 = vld [vmem:[#allocation3 + $0xd0] sm:$0xff]
    %v1597 = vld [vmem:[#allocation3 + $0xd8] sm:$0xff]
    %v1598 = vld [vmem:[#allocation3 + $0xe0] sm:$0xff]
    %v1599 = vld [vmem:[#allocation3 + $0xe8] sm:$0xff]
    %v1600 = vld [vmem:[#allocation3 + $0xf0] sm:$0xff]
    %v1601 = vld [vmem:[#allocation3 + $0xf8] sm:$0xff]
    %v1602 = vld [vmem:[#allocation3 + $0x100] sm:$0xff]
    %v1603 = vld [vmem:[#allocation3 + $0x108] sm:$0xff]
    %v1604 = vld [vmem:[#allocation3 + $0x110] sm:$0xff]
    %v1605 = vld [vmem:[#allocation3 + $0x118] sm:$0xff]
    %v1606 = vld [vmem:[#allocation3 + $0x120] sm:$0xff]
    %v1607 = vld [vmem:[#allocation3 + $0x128] sm:$0xff]
    %v1608 = vsel %vm313, %v1379, 0.0
    %v1609 = vsel %vm314, %v1380, 0.0
    %v1610 = vsel %vm315, %v1381, 0.0
    %v1611 = vsel %vm316, %v1382, 0.0
    %v1612 = vsel %vm317, %v1383, 0.0
    %v1613 = vsel %vm318, %v1384, 0.0
    %v1614 = vsel %vm319, %v1385, 0.0
    %v1615 = vsel %vm320, %v1386, 0.0
    %v1616 = vsel %vm321, %v1387, 0.0
    %v1617 = vsel %vm322, %v1388, 0.0
    %v1618 = vsel %vm323, %v1389, 0.0
    %v1619 = vsel %vm324, %v1390, 0.0
    %v1620 = vsel %vm325, %v1391, 0.0
    %v1621 = vsel %vm326, %v1392, 0.0
    %v1622 = vsel %vm327, %v1393, 0.0
    %v1623 = vsel %vm328, %v1394, 0.0
    %v1624 = vsel %vm329, %v1395, 0.0
    %v1625 = vsel %vm330, %v1396, 0.0
    %v1626 = vsel %vm331, %v1397, 0.0
    %v1627 = vsel %vm332, %v1398, 0.0
    %v1628 = vsel %vm333, %v1399, 0.0
    %v1629 = vsel %vm334, %v1400, 0.0
    %v1630 = vsel %vm335, %v1401, 0.0
    %v1631 = vsel %vm336, %v1402, 0.0
    %v1632 = vsel %vm337, %v1403, 0.0
    %v1633 = vsel %vm338, %v1404, 0.0
    %v1634 = vsel %vm339, %v1405, 0.0
    %v1635 = vsel %vm340, %v1406, 0.0
    %v1636 = vsel %vm341, %v1407, 0.0
    %v1637 = vsel %vm342, %v1408, 0.0
    %v1638 = vsel %vm343, %v1409, 0.0
    %v1639 = vsel %vm344, %v1410, 0.0
    %v1640 = vsel %vm345, %v1411, 0.0
    %v1641 = vsel %vm346, %v1412, 0.0
    %v1642 = vsel %vm347, %v1413, 0.0
    %v1643 = vsel %vm348, %v1414, 0.0
    %v1644 = vsel %vm349, %v1415, 0.0
    %v1645 = vsel %vm350, %v1416, 0.0
    %v1646 = vadd.f32 %v1570, %v1608
    %v1647 = vadd.f32 %v1571, %v1609
    %v1648 = vadd.f32 %v1572, %v1610
    %v1649 = vadd.f32 %v1573, %v1611
    %v1650 = vadd.f32 %v1574, %v1612
    %v1651 = vadd.f32 %v1575, %v1613
    %v1652 = vadd.f32 %v1576, %v1614
    %v1653 = vadd.f32 %v1577, %v1615
    %v1654 = vadd.f32 %v1578, %v1616
    %v1655 = vadd.f32 %v1579, %v1617
    %v1656 = vadd.f32 %v1580, %v1618
    %v1657 = vadd.f32 %v1581, %v1619
    %v1658 = vadd.f32 %v1582, %v1620
    %v1659 = vadd.f32 %v1583, %v1621
    %v1660 = vadd.f32 %v1584, %v1622
    %v1661 = vadd.f32 %v1585, %v1623
    %v1662 = vadd.f32 %v1586, %v1624
    %v1663 = vadd.f32 %v1587, %v1625
    %v1664 = vadd.f32 %v1588, %v1626
    %v1665 = vadd.f32 %v1589, %v1627
    %v1666 = vadd.f32 %v1590, %v1628
    %v1667 = vadd.f32 %v1591, %v1629
    %v1668 = vadd.f32 %v1592, %v1630
    %v1669 = vadd.f32 %v1593, %v1631
    %v1670 = vadd.f32 %v1594, %v1632
    %v1671 = vadd.f32 %v1595, %v1633
    %v1672 = vadd.f32 %v1596, %v1634
    %v1673 = vadd.f32 %v1597, %v1635
    %v1674 = vadd.f32 %v1598, %v1636
    %v1675 = vadd.f32 %v1599, %v1637
    %v1676 = vadd.f32 %v1600, %v1638
    %v1677 = vadd.f32 %v1601, %v1639
    %v1678 = vadd.f32 %v1602, %v1640
    %v1679 = vadd.f32 %v1603, %v1641
    %v1680 = vadd.f32 %v1604, %v1642
    %v1681 = vadd.f32 %v1605, %v1643
    %v1682 = vadd.f32 %v1606, %v1644
    %v1683 = vadd.f32 %v1607, %v1645
    %1684 = vst.msk [vmem:[#allocation3] sm:$0xff] %vm1531, %v1646
    %1685 = vst.msk [vmem:[#allocation3 + $0x8] sm:$0xff] %vm1531, %v1647
    %1686 = vst.msk [vmem:[#allocation3 + $0x10] sm:$0xff] %vm1531, %v1648
    %1687 = vst.msk [vmem:[#allocation3 + $0x18] sm:$0xff] %vm1531, %v1649
    %1688 = vst.msk [vmem:[#allocation3 + $0x20] sm:$0xff] %vm1531, %v1650
    %1689 = vst.msk [vmem:[#allocation3 + $0x28] sm:$0xff] %vm1531, %v1651
    %1690 = vst.msk [vmem:[#allocation3 + $0x30] sm:$0xff] %vm1531, %v1652
    %1691 = vst.msk [vmem:[#allocation3 + $0x38] sm:$0xff] %vm1531, %v1653
    %1692 = vst.msk [vmem:[#allocation3 + $0x40] sm:$0xff] %vm1531, %v1654
    %1693 = vst.msk [vmem:[#allocation3 + $0x48] sm:$0xff] %vm1531, %v1655
    %1694 = vst.msk [vmem:[#allocation3 + $0x50] sm:$0xff] %vm1531, %v1656
    %1695 = vst.msk [vmem:[#allocation3 + $0x58] sm:$0xff] %vm1531, %v1657
    %1696 = vst.msk [vmem:[#allocation3 + $0x60] sm:$0xff] %vm1531, %v1658
    %1697 = vst.msk [vmem:[#allocation3 + $0x68] sm:$0xff] %vm1531, %v1659
    %1698 = vst.msk [vmem:[#allocation3 + $0x70] sm:$0xff] %vm1531, %v1660
    %1699 = vst.msk [vmem:[#allocation3 + $0x78] sm:$0xff] %vm1531, %v1661
    %1700 = vst.msk [vmem:[#allocation3 + $0x80] sm:$0xff] %vm1531, %v1662
    %1701 = vst.msk [vmem:[#allocation3 + $0x88] sm:$0xff] %vm1531, %v1663
    %1702 = vst.msk [vmem:[#allocation3 + $0x90] sm:$0xff] %vm1531, %v1664
    %1703 = vst.msk [vmem:[#allocation3 + $0x98] sm:$0xff] %vm1531, %v1665
    %1704 = vst.msk [vmem:[#allocation3 + $0xa0] sm:$0xff] %vm1531, %v1666
    %1705 = vst.msk [vmem:[#allocation3 + $0xa8] sm:$0xff] %vm1531, %v1667
    %1706 = vst.msk [vmem:[#allocation3 + $0xb0] sm:$0xff] %vm1531, %v1668
    %1707 = vst.msk [vmem:[#allocation3 + $0xb8] sm:$0xff] %vm1531, %v1669
    %1708 = vst.msk [vmem:[#allocation3 + $0xc0] sm:$0xff] %vm1531, %v1670
    %1709 = vst.msk [vmem:[#allocation3 + $0xc8] sm:$0xff] %vm1531, %v1671
    %1710 = vst.msk [vmem:[#allocation3 + $0xd0] sm:$0xff] %vm1531, %v1672
    %1711 = vst.msk [vmem:[#allocation3 + $0xd8] sm:$0xff] %vm1531, %v1673
    %1712 = vst.msk [vmem:[#allocation3 + $0xe0] sm:$0xff] %vm1531, %v1674
    %1713 = vst.msk [vmem:[#allocation3 + $0xe8] sm:$0xff] %vm1531, %v1675
    %1714 = vst.msk [vmem:[#allocation3 + $0xf0] sm:$0xff] %vm1531, %v1676
    %1715 = vst.msk [vmem:[#allocation3 + $0xf8] sm:$0xff] %vm1531, %v1677
    %1716 = vst.msk [vmem:[#allocation3 + $0x100] sm:$0xff] %vm1531, %v1678
    %1717 = vst.msk [vmem:[#allocation3 + $0x108] sm:$0xff] %vm1531, %v1679
    %1718 = vst.msk [vmem:[#allocation3 + $0x110] sm:$0xff] %vm1531, %v1680
    %1719 = vst.msk [vmem:[#allocation3 + $0x118] sm:$0xff] %vm1531, %v1681
    %1720 = vst.msk [vmem:[#allocation3 + $0x120] sm:$0xff] %vm1531, %v1682
    %1721 = vst.msk [vmem:[#allocation3 + $0x128] sm:$0xff] %vm1531, %v1683
    // Predicated region
    $region14: #{tpu_custom_call.1} parent=1 // pred_check
      %p1722 = pneg %p76
    $region15: #{tpu_custom_call.1} parent=1 // pred_check_branch
      %1724 = sbr.rel (%p1722) target = $region17
    $region16: #{tpu_custom_call.1} parent=1 // pred_region
      %v1725 = vld [vmem:[#allocation2] sm:$0xff]
      %v1726 = vld [vmem:[#allocation2 + $0x8] sm:$0xff]
      %v1727 = vld [vmem:[#allocation2 + $0x10] sm:$0xff]
      %v1728 = vld [vmem:[#allocation2 + $0x18] sm:$0xff]
      %v1729 = vld [vmem:[#allocation2 + $0x20] sm:$0xff]
      %v1730 = vld [vmem:[#allocation2 + $0x28] sm:$0xff]
      %v1731 = vld [vmem:[#allocation2 + $0x30] sm:$0xff]
      %v1732 = vld [vmem:[#allocation2 + $0x38] sm:$0xff]
      %v1733 = vld [vmem:[#allocation2 + $0x40] sm:$0xff]
      %v1734 = vld [vmem:[#allocation2 + $0x48] sm:$0xff]
      %v1735 = vld [vmem:[#allocation2 + $0x50] sm:$0xff]
      %v1736 = vld [vmem:[#allocation2 + $0x58] sm:$0xff]
      %v1737 = vld [vmem:[#allocation2 + $0x60] sm:$0xff]
      %v1738 = vld [vmem:[#allocation2 + $0x68] sm:$0xff]
      %v1739 = vld [vmem:[#allocation2 + $0x70] sm:$0xff]
      %v1740 = vld [vmem:[#allocation2 + $0x78] sm:$0xff]
      %v1741 = vld [vmem:[#allocation2 + $0x80] sm:$0xff]
      %v1742 = vld [vmem:[#allocation2 + $0x88] sm:$0xff]
      %v1743 = vld [vmem:[#allocation2 + $0x90] sm:$0xff]
      %v1744 = vld [vmem:[#allocation2 + $0x98] sm:$0xff]
      %v1745 = vld [vmem:[#allocation2 + $0xa0] sm:$0xff]
      %v1746 = vld [vmem:[#allocation2 + $0xa8] sm:$0xff]
      %v1747 = vld [vmem:[#allocation2 + $0xb0] sm:$0xff]
      %v1748 = vld [vmem:[#allocation2 + $0xb8] sm:$0xff]
      %v1749 = vld [vmem:[#allocation2 + $0xc0] sm:$0xff]
      %v1750 = vld [vmem:[#allocation2 + $0xc8] sm:$0xff]
      %v1751 = vld [vmem:[#allocation2 + $0xd0] sm:$0xff]
      %v1752 = vld [vmem:[#allocation2 + $0xd8] sm:$0xff]
      %v1753 = vld [vmem:[#allocation2 + $0xe0] sm:$0xff]
      %v1754 = vld [vmem:[#allocation2 + $0xe8] sm:$0xff]
      %v1755 = vld [vmem:[#allocation2 + $0xf0] sm:$0xff]
      %v1756 = vld [vmem:[#allocation2 + $0xf8] sm:$0xff]
      %v1757 = vld [vmem:[#allocation2 + $0x100] sm:$0xff]
      %v1758 = vld [vmem:[#allocation2 + $0x108] sm:$0xff]
      %v1759 = vld [vmem:[#allocation2 + $0x110] sm:$0xff]
      %v1760 = vld [vmem:[#allocation2 + $0x118] sm:$0xff]
      %v1761 = vld [vmem:[#allocation2 + $0x120] sm:$0xff]
      %v1762 = vld [vmem:[#allocation2 + $0x128] sm:$0xff]
      %v1763 = vsel %vm1531, %v1725, 0.0
      %v1764 = vsel %vm1531, %v1726, 0.0
      %v1765 = vadd.f32 %v1763, %v1764
      %v1766 = vsel %vm1531, %v1727, 0.0
      %v1767 = vadd.f32 %v1765, %v1766
      %v1768 = vsel %vm1531, %v1728, 0.0
      %v1769 = vadd.f32 %v1767, %v1768
      %v1770 = vsel %vm1531, %v1729, 0.0
      %v1771 = vadd.f32 %v1769, %v1770
      %v1772 = vsel %vm1531, %v1730, 0.0
      %v1773 = vadd.f32 %v1771, %v1772
      %v1774 = vsel %vm1531, %v1731, 0.0
      %v1775 = vadd.f32 %v1773, %v1774
      %v1776 = vsel %vm1531, %v1732, 0.0
      %v1777 = vadd.f32 %v1775, %v1776
      %v1778 = vsel %vm1531, %v1733, 0.0
      %v1779 = vadd.f32 %v1777, %v1778
      %v1780 = vsel %vm1531, %v1734, 0.0
      %v1781 = vadd.f32 %v1779, %v1780
      %v1782 = vsel %vm1531, %v1735, 0.0
      %v1783 = vadd.f32 %v1781, %v1782
      %v1784 = vsel %vm1531, %v1736, 0.0
      %v1785 = vadd.f32 %v1783, %v1784
      %v1786 = vsel %vm1531, %v1737, 0.0
      %v1787 = vadd.f32 %v1785, %v1786
      %v1788 = vsel %vm1531, %v1738, 0.0
      %v1789 = vadd.f32 %v1787, %v1788
      %v1790 = vsel %vm1531, %v1739, 0.0
      %v1791 = vadd.f32 %v1789, %v1790
      %v1792 = vsel %vm1531, %v1740, 0.0
      %v1793 = vadd.f32 %v1791, %v1792
      %v1794 = vsel %vm1531, %v1741, 0.0
      %v1795 = vadd.f32 %v1793, %v1794
      %v1796 = vsel %vm1531, %v1742, 0.0
      %v1797 = vadd.f32 %v1795, %v1796
      %v1798 = vsel %vm1531, %v1743, 0.0
      %v1799 = vadd.f32 %v1797, %v1798
      %v1800 = vsel %vm1531, %v1744, 0.0
      %v1801 = vadd.f32 %v1799, %v1800
      %v1802 = vsel %vm1531, %v1745, 0.0
      %v1803 = vadd.f32 %v1801, %v1802
      %v1804 = vsel %vm1531, %v1746, 0.0
      %v1805 = vadd.f32 %v1803, %v1804
      %v1806 = vsel %vm1531, %v1747, 0.0
      %v1807 = vadd.f32 %v1805, %v1806
      %v1808 = vsel %vm1531, %v1748, 0.0
      %v1809 = vadd.f32 %v1807, %v1808
      %v1810 = vsel %vm1531, %v1749, 0.0
      %v1811 = vadd.f32 %v1809, %v1810
      %v1812 = vsel %vm1531, %v1750, 0.0
      %v1813 = vadd.f32 %v1811, %v1812
      %v1814 = vsel %vm1531, %v1751, 0.0
      %v1815 = vadd.f32 %v1813, %v1814
      %v1816 = vsel %vm1531, %v1752, 0.0
      %v1817 = vadd.f32 %v1815, %v1816
      %v1818 = vsel %vm1531, %v1753, 0.0
      %v1819 = vadd.f32 %v1817, %v1818
      %v1820 = vsel %vm1531, %v1754, 0.0
      %v1821 = vadd.f32 %v1819, %v1820
      %v1822 = vsel %vm1531, %v1755, 0.0
      %v1823 = vadd.f32 %v1821, %v1822
      %v1824 = vsel %vm1531, %v1756, 0.0
      %v1825 = vadd.f32 %v1823, %v1824
      %v1826 = vsel %vm1531, %v1757, 0.0
      %v1827 = vadd.f32 %v1825, %v1826
      %v1828 = vsel %vm1531, %v1758, 0.0
      %v1829 = vadd.f32 %v1827, %v1828
      %v1830 = vsel %vm1531, %v1759, 0.0
      %v1831 = vadd.f32 %v1829, %v1830
      %v1832 = vsel %vm1531, %v1760, 0.0
      %v1833 = vadd.f32 %v1831, %v1832
      %v1834 = vsel %vm1531, %v1761, 0.0
      %v1835 = vadd.f32 %v1833, %v1834
      %v1836 = vsel %vm1531, %v1762, 0.0
      %v1837 = vadd.f32 %v1835, %v1836
      %1838 = vadd.xlane.f32.xlu0 %v1837
      %v1839 = vpop.xlane.xlu0 %1838
      %v1840 = vrot.slane %v1839, 4
      %v1841 = vadd.f32 %v1839, %v1840
      %v1842 = vrot.slane %v1841, 2
      %v1843 = vadd.f32 %v1841, %v1842
      %v1844 = vrot.slane %v1843, 1
      %v1845 = vadd.f32 %v1843, %v1844
      %s1846 = vtos %v1845
      %v1847 = vld [vmem:[#allocation3] sm:$0xff]
      %v1848 = vld [vmem:[#allocation3 + $0x8] sm:$0xff]
      %v1849 = vld [vmem:[#allocation3 + $0x10] sm:$0xff]
      %v1850 = vld [vmem:[#allocation3 + $0x18] sm:$0xff]
      %v1851 = vld [vmem:[#allocation3 + $0x20] sm:$0xff]
      %v1852 = vld [vmem:[#allocation3 + $0x28] sm:$0xff]
      %v1853 = vld [vmem:[#allocation3 + $0x30] sm:$0xff]
      %v1854 = vld [vmem:[#allocation3 + $0x38] sm:$0xff]
      %v1855 = vld [vmem:[#allocation3 + $0x40] sm:$0xff]
      %v1856 = vld [vmem:[#allocation3 + $0x48] sm:$0xff]
      %v1857 = vld [vmem:[#allocation3 + $0x50] sm:$0xff]
      %v1858 = vld [vmem:[#allocation3 + $0x58] sm:$0xff]
      %v1859 = vld [vmem:[#allocation3 + $0x60] sm:$0xff]
      %v1860 = vld [vmem:[#allocation3 + $0x68] sm:$0xff]
      %v1861 = vld [vmem:[#allocation3 + $0x70] sm:$0xff]
      %v1862 = vld [vmem:[#allocation3 + $0x78] sm:$0xff]
      %v1863 = vld [vmem:[#allocation3 + $0x80] sm:$0xff]
      %v1864 = vld [vmem:[#allocation3 + $0x88] sm:$0xff]
      %v1865 = vld [vmem:[#allocation3 + $0x90] sm:$0xff]
      %v1866 = vld [vmem:[#allocation3 + $0x98] sm:$0xff]
      %v1867 = vld [vmem:[#allocation3 + $0xa0] sm:$0xff]
      %v1868 = vld [vmem:[#allocation3 + $0xa8] sm:$0xff]
      %v1869 = vld [vmem:[#allocation3 + $0xb0] sm:$0xff]
      %v1870 = vld [vmem:[#allocation3 + $0xb8] sm:$0xff]
      %v1871 = vld [vmem:[#allocation3 + $0xc0] sm:$0xff]
      %v1872 = vld [vmem:[#allocation3 + $0xc8] sm:$0xff]
      %v1873 = vld [vmem:[#allocation3 + $0xd0] sm:$0xff]
      %v1874 = vld [vmem:[#allocation3 + $0xd8] sm:$0xff]
      %v1875 = vld [vmem:[#allocation3 + $0xe0] sm:$0xff]
      %v1876 = vld [vmem:[#allocation3 + $0xe8] sm:$0xff]
      %v1877 = vld [vmem:[#allocation3 + $0xf0] sm:$0xff]
      %v1878 = vld [vmem:[#allocation3 + $0xf8] sm:$0xff]
      %v1879 = vld [vmem:[#allocation3 + $0x100] sm:$0xff]
      %v1880 = vld [vmem:[#allocation3 + $0x108] sm:$0xff]
      %v1881 = vld [vmem:[#allocation3 + $0x110] sm:$0xff]
      %v1882 = vld [vmem:[#allocation3 + $0x118] sm:$0xff]
      %v1883 = vld [vmem:[#allocation3 + $0x120] sm:$0xff]
      %v1884 = vld [vmem:[#allocation3 + $0x128] sm:$0xff]
      %v1885 = vsel %vm1531, %v1847, 0.0
      %v1886 = vsel %vm1531, %v1848, 0.0
      %v1887 = vadd.f32 %v1885, %v1886
      %v1888 = vsel %vm1531, %v1849, 0.0
      %v1889 = vadd.f32 %v1887, %v1888
      %v1890 = vsel %vm1531, %v1850, 0.0
      %v1891 = vadd.f32 %v1889, %v1890
      %v1892 = vsel %vm1531, %v1851, 0.0
      %v1893 = vadd.f32 %v1891, %v1892
      %v1894 = vsel %vm1531, %v1852, 0.0
      %v1895 = vadd.f32 %v1893, %v1894
      %v1896 = vsel %vm1531, %v1853, 0.0
      %v1897 = vadd.f32 %v1895, %v1896
      %v1898 = vsel %vm1531, %v1854, 0.0
      %v1899 = vadd.f32 %v1897, %v1898
      %v1900 = vsel %vm1531, %v1855, 0.0
      %v1901 = vadd.f32 %v1899, %v1900
      %v1902 = vsel %vm1531, %v1856, 0.0
      %v1903 = vadd.f32 %v1901, %v1902
      %v1904 = vsel %vm1531, %v1857, 0.0
      %v1905 = vadd.f32 %v1903, %v1904
      %v1906 = vsel %vm1531, %v1858, 0.0
      %v1907 = vadd.f32 %v1905, %v1906
      %v1908 = vsel %vm1531, %v1859, 0.0
      %v1909 = vadd.f32 %v1907, %v1908
      %v1910 = vsel %vm1531, %v1860, 0.0
      %v1911 = vadd.f32 %v1909, %v1910
      %v1912 = vsel %vm1531, %v1861, 0.0
      %v1913 = vadd.f32 %v1911, %v1912
      %v1914 = vsel %vm1531, %v1862, 0.0
      %v1915 = vadd.f32 %v1913, %v1914
      %v1916 = vsel %vm1531, %v1863, 0.0
      %v1917 = vadd.f32 %v1915, %v1916
      %v1918 = vsel %vm1531, %v1864, 0.0
      %v1919 = vadd.f32 %v1917, %v1918
      %v1920 = vsel %vm1531, %v1865, 0.0
      %v1921 = vadd.f32 %v1919, %v1920
      %v1922 = vsel %vm1531, %v1866, 0.0
      %v1923 = vadd.f32 %v1921, %v1922
      %v1924 = vsel %vm1531, %v1867, 0.0
      %v1925 = vadd.f32 %v1923, %v1924
      %v1926 = vsel %vm1531, %v1868, 0.0
      %v1927 = vadd.f32 %v1925, %v1926
      %v1928 = vsel %vm1531, %v1869, 0.0
      %v1929 = vadd.f32 %v1927, %v1928
      %v1930 = vsel %vm1531, %v1870, 0.0
      %v1931 = vadd.f32 %v1929, %v1930
      %v1932 = vsel %vm1531, %v1871, 0.0
      %v1933 = vadd.f32 %v1931, %v1932
      %v1934 = vsel %vm1531, %v1872, 0.0
      %v1935 = vadd.f32 %v1933, %v1934
      %v1936 = vsel %vm1531, %v1873, 0.0
      %v1937 = vadd.f32 %v1935, %v1936
      %v1938 = vsel %vm1531, %v1874, 0.0
      %v1939 = vadd.f32 %v1937, %v1938
      %v1940 = vsel %vm1531, %v1875, 0.0
      %v1941 = vadd.f32 %v1939, %v1940
      %v1942 = vsel %vm1531, %v1876, 0.0
      %v1943 = vadd.f32 %v1941, %v1942
      %v1944 = vsel %vm1531, %v1877, 0.0
      %v1945 = vadd.f32 %v1943, %v1944
      %v1946 = vsel %vm1531, %v1878, 0.0
      %v1947 = vadd.f32 %v1945, %v1946
      %v1948 = vsel %vm1531, %v1879, 0.0
      %v1949 = vadd.f32 %v1947, %v1948
      %v1950 = vsel %vm1531, %v1880, 0.0
      %v1951 = vadd.f32 %v1949, %v1950
      %v1952 = vsel %vm1531, %v1881, 0.0
      %v1953 = vadd.f32 %v1951, %v1952
      %v1954 = vsel %vm1531, %v1882, 0.0
      %v1955 = vadd.f32 %v1953, %v1954
      %v1956 = vsel %vm1531, %v1883, 0.0
      %v1957 = vadd.f32 %v1955, %v1956
      %v1958 = vsel %vm1531, %v1884, 0.0
      %v1959 = vadd.f32 %v1957, %v1958
      %1960 = vadd.xlane.f32.xlu0 %v1959
      %v1961 = vpop.xlane.xlu0 %1960
      %v1962 = vrot.slane %v1961, 4
      %v1963 = vadd.f32 %v1961, %v1962
      %v1964 = vrot.slane %v1963, 2
      %v1965 = vadd.f32 %v1963, %v1964
      %v1966 = vrot.slane %v1965, 1
      %v1967 = vadd.f32 %v1965, %v1966
      %s1968 = vtos %v1967
      %vm1969 = vcmp.eq.s32.totalorder %v618, 0
      %vm1970 = vcmp.eq.s32.totalorder %v618, 1
      %v1971 = vstv %s1968
      %v1972 = vsel %vm1970, %v1971, 0.0
      %v1973 = vstv %s1846
      %v1974 = vsel %vm1969, %v1973, %v1972
      %1975 = vst [vmem:[#allocation4] sm:$0xff] %v1974
    $region17: #{tpu_custom_call.1} parent=1 // pred_fallthru
      _
    // Predicated region
    $region18: #{tpu_custom_call.1} parent=1 // pred_check
      _
    $region19: #{tpu_custom_call.1} parent=1 // pred_check_branch
      %1977 = sbr.rel (0) target = $region21
    $region20: #{tpu_custom_call.1} parent=1 // pred_region
      %s1979 = ssub.s32 128, 128
      %1980 = vsyncadd [#allocation5], %s1979
      %s1982 = sshll.u32 [#allocation4], 4
      %s1983 = int_to_ptr.vmem [resolvable:$true] %s1982
      %1985 = dma.vmem_to_hbm [thread:$0]  %s1983, 128, %s2, [#allocation5]
    $region21: #{tpu_custom_call.1} parent=1 // pred_fallthru
      _
    // Predicated region
    $region22: #{tpu_custom_call.1} parent=1 // pred_check
      _
    $region23: #{tpu_custom_call.1} parent=1 // pred_check_branch
      %1987 = sbr.rel (0) target = $region25
    $region24: #{tpu_custom_call.1} parent=1 // pred_region
      %1988 = dma.done [#allocation5], 128
    $region25: #{tpu_custom_call.1} parent=1 // pred_fallthru
      _
    %1989 = vsyncpa [#allocation5], 1

</llo_original>
